<compile_context>
chip_gen: v7x
topology: tpu7x:2x2x1
jax: 0.10.0
libtpu: 0.0.40
codegen_flags: <defaults>
</compile_context>

<pallas_src>
import jax
import jax.numpy as jnp
from jax import lax
from jax.experimental import pallas as pl
from jax.experimental.pallas import tpu as pltpu

# ----------------------------------------------------------------------------
# Small config consistent with the module's __init__
# ----------------------------------------------------------------------------
VOCAB = 32
MODEL_DIM = 8                                    # embedding dim
HALF_WND_SIZES = [1, 2]
WND_SIZES = [2 * h + 1 for h in HALF_WND_SIZES]  # [3, 5]
NW = len(WND_SIZES)
KHMAX = max(WND_SIZES)                           # 5 taps after centering both windows
PAD = KHMAX // 2                                 # 2 halo rows each side
CHANNELS = [4, 8]
POOL = 2                                         # MaxPool2d(2)
DIALOG_LEN = 8
ANS_LEN = 8
BATCH = 2

H0 = DIALOG_LEN + ANS_LEN                        # 16 rows into conv layer 1
W0 = MODEL_DIM                                   # 8  cols (conv kw = 2*MODEL_DIM//2)
C1, C2 = CHANNELS
H1, W1 = H0 // POOL, C1 // POOL                  # 8, 2 after layer-1 pool
H2, W2 = H1 // POOL, C2 // POOL                  # 4, 4 after layer-2 pool
OUT_FEATS = H2 * W2                              # 16 = seq_len * channels[-1] // 2

HIGH = lax.Precision.HIGHEST


# ----------------------------------------------------------------------------
# Fused Pallas kernel
# ----------------------------------------------------------------------------
def _conv_relu_mean_pool(src_rows, xim_ref, mean_ref, w_ref, b_ref, B, H, W, C):
    """One module 'layer': Conv2d(1->C, (kh, W)) for NW window sizes (row padded),
    relu, mean over windows, 2x2 max-pool.  Returns pooled value [B*H//2, C//2]."""
    # im2col into a zeroed VMEM scratch: row b*H+h holds the KHMAX shifted taps, so the
    # whole layer's conv is a single [B*H, KHMAX*W] @ [KHMAX*W, NW*C] MXU matmul.
    # Zeroing the scratch implements the conv's row zero-padding in-kernel.
    xim_ref[...] = jnp.zeros(xim_ref.shape, xim_ref.dtype)
    for b in range(B):
        for j in range(KHMAX):
            d = j - PAD
            lo, hi = max(0, -d), min(H, H - d)       # output rows whose tap is in-bounds
            xim_ref[b * H + lo:b * H + hi, j * W:(j + 1) * W] = src_rows(b, lo + d, hi + d)

    y = jnp.dot(xim_ref[...], w_ref[...], precision=HIGH,
                preferred_element_type=jnp.float32) + b_ref[...]
    y = jnp.maximum(y, 0.0)                          # relu (dropout = identity in eval)
    acc = y[:, 0:C]
    for i in range(1, NW):                           # mean over the NW window sizes
        acc = acc + y[:, i * C:(i + 1) * C]
    mean_ref[...] = acc * (1.0 / NW)                 # park in VMEM for strided row loads

    # 2x2 max-pool with no MXU work:
    #   rows    : stride-2 ref loads pick even / odd conv rows (pairs never cross the
    #             batch boundary because H is even),
    #   channels: packed-weight columns are ordered [even ch, odd ch] per window, so
    #             the channel pairs are the two contiguous column halves.
    half = (B * H) // 2
    rmax = jnp.maximum(mean_ref[pl.ds(0, half, 2), :],
                       mean_ref[pl.ds(1, half, 2), :])      # [B*H/2, C]
    return jnp.maximum(rmax[:, :C // 2], rmax[:, C // 2:])  # [B*H/2, C/2]


def _fused_forward_kernel(x_ref, w1_ref, b1_ref, w2_ref, b2_ref, lw_ref, lb_ref,
                          o_ref, xim1_ref, m1_ref, xim2_ref, m2_ref, feat_ref):
    # layer 1: rows come straight from the [B, H0, W0] embedded input
    p1 = _conv_relu_mean_pool(lambda b, r0, r1: x_ref[b, r0:r1, :],
                              xim1_ref, m1_ref, w1_ref, b1_ref,
                              BATCH, H0, W0, C1)             # [B*H1, W1]
    # layer 2: rows come from the pooled layer-1 value (stays on-core)
    p2 = _conv_relu_mean_pool(lambda b, r0, r1: p1[b * H1 + r0:b * H1 + r1, :],
                              xim2_ref, m2_ref, w2_ref, b2_ref,
                              BATCH, H1, W1, C2)             # [B*H2, W2]

    # flatten: torch .view(bsize, -1) over the [B, 1, H2, C2//2] pooled map
    for b in range(BATCH):
        for h in range(H2):
            feat_ref[b:b + 1, h * W2:(h + 1) * W2] = p2[b * H2 + h:b * H2 + h + 1, :]

    # out_linear + softmax
    z = jnp.dot(feat_ref[...], lw_ref[...], precision=HIGH,
                preferred_element_type=jnp.float32) + lb_ref[...]
    z = z - jnp.max(z, axis=-1, keepdims=True)
    e = jnp.exp(z)
    o_ref[...] = e / jnp.sum(e, axis=-1, keepdims=True)


@jax.jit
def discriminator_forward(params, dialog_ids, neg_ids):
    # embedding lookup + concat == data_process(ans=None); tiny gather left as JAX glue
    ids = jnp.concatenate([dialog_ids, neg_ids], axis=1)     # [B, H0]
    x = jnp.take(params["emb"], ids, axis=0)                 # [B, H0, W0]
    vmem = pltpu.MemorySpace.VMEM
    probs = pl.pallas_call(
        _fused_forward_kernel,
        out_shape=jax.ShapeDtypeStruct((BATCH, 2), jnp.float32),
        in_specs=[pl.BlockSpec(memory_space=vmem) for _ in range(7)],
        out_specs=pl.BlockSpec(memory_space=vmem),
        scratch_shapes=[
            pltpu.VMEM((BATCH * H0, KHMAX * W0), jnp.float32),  # layer-1 im2col (padded)
            pltpu.VMEM((BATCH * H0, C1), jnp.float32),          # layer-1 mean (for pool)
            pltpu.VMEM((BATCH * H1, KHMAX * W1), jnp.float32),  # layer-2 im2col (padded)
            pltpu.VMEM((BATCH * H1, C2), jnp.float32),          # layer-2 mean (for pool)
            pltpu.VMEM((BATCH, OUT_FEATS), jnp.float32),        # flattened features
        ],
    )(x, params["w1"], params["b1"], params["w2"], params["b2"],
      params["lin_w"], params["lin_b"])
    return probs[:, 0]
    # TODO(synk): training branch (ans is not None) with torch.randperm shuffle and
    # cross-entropy/accuracy is not implemented; only the ans=None inference path is.


# ----------------------------------------------------------------------------
# Deterministic parameter init (+ host-side weight packing) and pure-JAX reference
# ----------------------------------------------------------------------------
def _pack_conv_layer(per_window, kw, C):
    """per_window: list of (w [C,1,wnd,kw], b [C]).
    Returns packed (W [KHMAX*kw, NW*C], b [1, NW*C]) with taps centered to KHMAX and
    channel columns permuted to [evens, odds] per window (for the matmul-free pool)."""
    perm = jnp.array(list(range(0, C, 2)) + list(range(1, C, 2)))
    wcols, bcols = [], []
    for (w, b) in per_window:
        wnd = w.shape[2]
        off = (KHMAX - wnd) // 2                       # center-pad taps to KHMAX
        wp = jnp.zeros((KHMAX, kw, C), jnp.float32)
        wp = wp.at[off:off + wnd].set(jnp.transpose(w[:, 0], (1, 2, 0)))
        wcols.append(wp.reshape(KHMAX * kw, C)[:, perm])
        bcols.append(b[perm])
    return (jnp.concatenate(wcols, axis=1),
            jnp.concatenate(bcols, axis=0).reshape(1, NW * C))


def init_params(key):
    keys = jax.random.split(key, 12)
    emb = jax.random.normal(keys[0], (VOCAB, MODEL_DIM), jnp.float32) * 0.5
    channels_list = [2 * MODEL_DIM] + CHANNELS
    packed, ref_layers = [], []
    ki = 1
    for l, C in enumerate(CHANNELS):
        kw = channels_list[l] // 2                     # conv kernel width (== input W)
        per_window, ref_per_window = [], []
        for wnd in WND_SIZES:
            w = jax.random.normal(keys[ki], (C, 1, wnd, kw), jnp.float32) / ((wnd * kw) ** 0.5)
            b = jax.random.normal(keys[ki + 1], (C,), jnp.float32) * 0.1
            ki += 2
            per_window.append((w, b))
            ref_per_window.append((w, b, wnd // 2))
        packed.append(_pack_conv_layer(per_window, kw, C))
        ref_layers.append(ref_per_window)
    lin_w = jax.random.normal(keys[ki], (OUT_FEATS, 2), jnp.float32) / (OUT_FEATS ** 0.5)
    lin_b = jax.random.normal(keys[ki + 1], (2,), jnp.float32) * 0.1
    (w1, b1), (w2, b2) = packed
    params = dict(emb=emb, w1=w1, b1=b1, w2=w2, b2=b2,
                  lin_w=lin_w, lin_b=lin_b.reshape(1, 2))
    ref = dict(emb=emb, layers=ref_layers, lin_w=lin_w, lin_b=lin_b)
    return params, ref


def reference_forward(ref, dialog_ids, neg_ids):
    ids = jnp.concatenate([dialog_ids, neg_ids], axis=1)
    inp = jnp.take(ref["emb"], ids, axis=0)[:, None, :, :]   # NCHW, C=1
    for tw in ref["layers"]:
        outs = []
        for (w, b, pad) in tw:
            y = lax.conv_general_dilated(inp, w, (1, 1), ((pad, pad), (0, 0)),
                                         dimension_numbers=("NCHW", "OIHW", "NCHW"),
                                         precision=HIGH)
            outs.append(jnp.maximum(y + b[None, :, None, None], 0.0))
        lay = sum(outs) / len(outs)                           # [B, C, H, 1]
        lay = jnp.transpose(lay, (0, 3, 2, 1))                # transpose(1, -1)
        Bq, one, Hh, Cc = lay.shape
        inp = lay.reshape(Bq, one, Hh // 2, 2, Cc // 2, 2).max(axis=(3, 5))
    feats = inp.reshape(inp.shape[0], -1)
    logits = jax.nn.softmax(
        jnp.dot(feats, ref["lin_w"], precision=HIGH) + ref["lin_b"], axis=-1)
    return logits[:, 0]


# ----------------------------------------------------------------------------
if __name__ == "__main__":
    key = jax.random.PRNGKey(0)
    kp, kd, kn = jax.random.split(key, 3)
    params, ref = init_params(kp)
    dialog_ids = jax.random.randint(kd, (BATCH, DIALOG_LEN), 0, VOCAB, dtype=jnp.int32)
    neg_ids = jax.random.randint(kn, (BATCH, ANS_LEN), 0, VOCAB, dtype=jnp.int32)

    out = jax.block_until_ready(discriminator_forward(params, dialog_ids, neg_ids))

    expected = reference_forward(ref, dialog_ids, neg_ids)
    assert out.shape == (BATCH,), out.shape
    assert jnp.allclose(out, expected, atol=1e-4, rtol=1e-4), (out, expected)
    print("KERNEL_OK")
</pallas_src>

<mosaic_0001>
module attributes {stable_mosaic.version = 11 : i64} {
  func.func @_fused_forward_kernel(%arg0: memref<2x16x8xf32, #tpu.memory_space<vmem>>, %arg1: memref<40x8xf32, #tpu.memory_space<vmem>>, %arg2: memref<1x8xf32, #tpu.memory_space<vmem>>, %arg3: memref<10x16xf32, #tpu.memory_space<vmem>>, %arg4: memref<1x16xf32, #tpu.memory_space<vmem>>, %arg5: memref<16x2xf32, #tpu.memory_space<vmem>>, %arg6: memref<1x2xf32, #tpu.memory_space<vmem>>, %arg7: memref<2x2xf32, #tpu.memory_space<vmem>>, %arg8: memref<32x40xf32, #tpu.memory_space<vmem>>, %arg9: memref<32x4xf32, #tpu.memory_space<vmem>>, %arg10: memref<16x10xf32, #tpu.memory_space<vmem>>, %arg11: memref<16x8xf32, #tpu.memory_space<vmem>>, %arg12: memref<2x16xf32, #tpu.memory_space<vmem>>) attributes {dimension_semantics = [], scalar_prefetch = 0 : i64, scratch_operands = 5 : i64, tpu.core_type = #tpu.core_type<tc>} {
    %cst = arith.constant 0.000000e+00 : f32
    %0 = vector.broadcast %cst : f32 to vector<32x40xf32>
    %c0 = arith.constant 0 : index
    %c0_0 = arith.constant 0 : index
    %1 = vector.load %arg8[%c0, %c0_0] : memref<32x40xf32, #tpu.memory_space<vmem>>, vector<32x40xf32>
    tpu.vector_store %arg8[%c0, %c0_0], %0 {strides = array<i32>} : memref<32x40xf32, #tpu.memory_space<vmem>>, vector<32x40xf32>,
    %c0_1 = arith.constant 0 : index
    %c0_2 = arith.constant 0 : index
    %c0_3 = arith.constant 0 : index
    %2 = vector.load %arg0[%c0_1, %c0_2, %c0_3] : memref<2x16x8xf32, #tpu.memory_space<vmem>>, vector<1x14x8xf32>
    %3 = vector.shape_cast %2 : vector<1x14x8xf32> to vector<14x8xf32>
    %c2 = arith.constant 2 : index
    %c0_4 = arith.constant 0 : index
    %4 = vector.load %arg8[%c2, %c0_4] : memref<32x40xf32, #tpu.memory_space<vmem>>, vector<14x8xf32>
    tpu.vector_store %arg8[%c2, %c0_4], %3 {strides = array<i32>} : memref<32x40xf32, #tpu.memory_space<vmem>>, vector<14x8xf32>,
    %c0_5 = arith.constant 0 : index
    %c0_6 = arith.constant 0 : index
    %c0_7 = arith.constant 0 : index
    %5 = vector.load %arg0[%c0_5, %c0_6, %c0_7] : memref<2x16x8xf32, #tpu.memory_space<vmem>>, vector<1x15x8xf32>
    %6 = vector.shape_cast %5 : vector<1x15x8xf32> to vector<15x8xf32>
    %c1 = arith.constant 1 : index
    %c8 = arith.constant 8 : index
    %7 = vector.load %arg8[%c1, %c8] : memref<32x40xf32, #tpu.memory_space<vmem>>, vector<15x8xf32>
    tpu.vector_store %arg8[%c1, %c8], %6 {strides = array<i32>} : memref<32x40xf32, #tpu.memory_space<vmem>>, vector<15x8xf32>,
    %c0_8 = arith.constant 0 : index
    %c0_9 = arith.constant 0 : index
    %c0_10 = arith.constant 0 : index
    %8 = vector.load %arg0[%c0_8, %c0_9, %c0_10] : memref<2x16x8xf32, #tpu.memory_space<vmem>>, vector<1x16x8xf32>
    %9 = vector.shape_cast %8 : vector<1x16x8xf32> to vector<16x8xf32>
    %c0_11 = arith.constant 0 : index
    %c16 = arith.constant 16 : index
    %10 = vector.load %arg8[%c0_11, %c16] : memref<32x40xf32, #tpu.memory_space<vmem>>, vector<16x8xf32>
    tpu.vector_store %arg8[%c0_11, %c16], %9 {strides = array<i32>} : memref<32x40xf32, #tpu.memory_space<vmem>>, vector<16x8xf32>,
    %c0_12 = arith.constant 0 : index
    %c1_13 = arith.constant 1 : index
    %c0_14 = arith.constant 0 : index
    %11 = vector.load %arg0[%c0_12, %c1_13, %c0_14] : memref<2x16x8xf32, #tpu.memory_space<vmem>>, vector<1x15x8xf32>
    %12 = vector.shape_cast %11 : vector<1x15x8xf32> to vector<15x8xf32>
    %c0_15 = arith.constant 0 : index
    %c24 = arith.constant 24 : index
    %13 = vector.load %arg8[%c0_15, %c24] : memref<32x40xf32, #tpu.memory_space<vmem>>, vector<15x8xf32>
    tpu.vector_store %arg8[%c0_15, %c24], %12 {strides = array<i32>} : memref<32x40xf32, #tpu.memory_space<vmem>>, vector<15x8xf32>,
    %c0_16 = arith.constant 0 : index
    %c2_17 = arith.constant 2 : index
    %c0_18 = arith.constant 0 : index
    %14 = vector.load %arg0[%c0_16, %c2_17, %c0_18] : memref<2x16x8xf32, #tpu.memory_space<vmem>>, vector<1x14x8xf32>
    %15 = vector.shape_cast %14 : vector<1x14x8xf32> to vector<14x8xf32>
    %c0_19 = arith.constant 0 : index
    %c32 = arith.constant 32 : index
    %16 = vector.load %arg8[%c0_19, %c32] : memref<32x40xf32, #tpu.memory_space<vmem>>, vector<14x8xf32>
    tpu.vector_store %arg8[%c0_19, %c32], %15 {strides = array<i32>} : memref<32x40xf32, #tpu.memory_space<vmem>>, vector<14x8xf32>,
    %c1_20 = arith.constant 1 : index
    %c0_21 = arith.constant 0 : index
    %c0_22 = arith.constant 0 : index
    %17 = vector.load %arg0[%c1_20, %c0_21, %c0_22] : memref<2x16x8xf32, #tpu.memory_space<vmem>>, vector<1x14x8xf32>
    %18 = vector.shape_cast %17 : vector<1x14x8xf32> to vector<14x8xf32>
    %c18 = arith.constant 18 : index
    %c0_23 = arith.constant 0 : index
    %19 = vector.load %arg8[%c18, %c0_23] : memref<32x40xf32, #tpu.memory_space<vmem>>, vector<14x8xf32>
    tpu.vector_store %arg8[%c18, %c0_23], %18 {strides = array<i32>} : memref<32x40xf32, #tpu.memory_space<vmem>>, vector<14x8xf32>,
    %c1_24 = arith.constant 1 : index
    %c0_25 = arith.constant 0 : index
    %c0_26 = arith.constant 0 : index
    %20 = vector.load %arg0[%c1_24, %c0_25, %c0_26] : memref<2x16x8xf32, #tpu.memory_space<vmem>>, vector<1x15x8xf32>
    %21 = vector.shape_cast %20 : vector<1x15x8xf32> to vector<15x8xf32>
    %c17 = arith.constant 17 : index
    %c8_27 = arith.constant 8 : index
    %22 = vector.load %arg8[%c17, %c8_27] : memref<32x40xf32, #tpu.memory_space<vmem>>, vector<15x8xf32>
    tpu.vector_store %arg8[%c17, %c8_27], %21 {strides = array<i32>} : memref<32x40xf32, #tpu.memory_space<vmem>>, vector<15x8xf32>,
    %c1_28 = arith.constant 1 : index
    %c0_29 = arith.constant 0 : index
    %c0_30 = arith.constant 0 : index
    %23 = vector.load %arg0[%c1_28, %c0_29, %c0_30] : memref<2x16x8xf32, #tpu.memory_space<vmem>>, vector<1x16x8xf32>
    %24 = vector.shape_cast %23 : vector<1x16x8xf32> to vector<16x8xf32>
    %c16_31 = arith.constant 16 : index
    %c16_32 = arith.constant 16 : index
    %25 = vector.load %arg8[%c16_31, %c16_32] : memref<32x40xf32, #tpu.memory_space<vmem>>, vector<16x8xf32>
    tpu.vector_store %arg8[%c16_31, %c16_32], %24 {strides = array<i32>} : memref<32x40xf32, #tpu.memory_space<vmem>>, vector<16x8xf32>,
    %c1_33 = arith.constant 1 : index
    %c1_34 = arith.constant 1 : index
    %c0_35 = arith.constant 0 : index
    %26 = vector.load %arg0[%c1_33, %c1_34, %c0_35] : memref<2x16x8xf32, #tpu.memory_space<vmem>>, vector<1x15x8xf32>
    %27 = vector.shape_cast %26 : vector<1x15x8xf32> to vector<15x8xf32>
    %c16_36 = arith.constant 16 : index
    %c24_37 = arith.constant 24 : index
    %28 = vector.load %arg8[%c16_36, %c24_37] : memref<32x40xf32, #tpu.memory_space<vmem>>, vector<15x8xf32>
    tpu.vector_store %arg8[%c16_36, %c24_37], %27 {strides = array<i32>} : memref<32x40xf32, #tpu.memory_space<vmem>>, vector<15x8xf32>,
    %c1_38 = arith.constant 1 : index
    %c2_39 = arith.constant 2 : index
    %c0_40 = arith.constant 0 : index
    %29 = vector.load %arg0[%c1_38, %c2_39, %c0_40] : memref<2x16x8xf32, #tpu.memory_space<vmem>>, vector<1x14x8xf32>
    %30 = vector.shape_cast %29 : vector<1x14x8xf32> to vector<14x8xf32>
    %c16_41 = arith.constant 16 : index
    %c32_42 = arith.constant 32 : index
    %31 = vector.load %arg8[%c16_41, %c32_42] : memref<32x40xf32, #tpu.memory_space<vmem>>, vector<14x8xf32>
    tpu.vector_store %arg8[%c16_41, %c32_42], %30 {strides = array<i32>} : memref<32x40xf32, #tpu.memory_space<vmem>>, vector<14x8xf32>,
    %c0_43 = arith.constant 0 : index
    %c0_44 = arith.constant 0 : index
    %32 = vector.load %arg8[%c0_43, %c0_44] : memref<32x40xf32, #tpu.memory_space<vmem>>, vector<32x40xf32>
    %c0_45 = arith.constant 0 : index
    %c0_46 = arith.constant 0 : index
    %33 = vector.load %arg1[%c0_45, %c0_46] : memref<40x8xf32, #tpu.memory_space<vmem>>, vector<40x8xf32>
    %cst_47 = arith.constant dense<0.000000e+00> : vector<32x8xf32>
    %34 = tpu.matmul %32, %33, %cst_47 {dimension_numbers = #tpu.dot_dimension_numbers<[1], [0], [0], [1], [0, 0, 1, 1], [], []>, precision = #tpu.contract_precision<fp32>} : vector<32x40xf32>, vector<40x8xf32>, vector<32x8xf32> -> vector<32x8xf32>
    %c0_48 = arith.constant 0 : index
    %c0_49 = arith.constant 0 : index
    %35 = vector.load %arg2[%c0_48, %c0_49] : memref<1x8xf32, #tpu.memory_space<vmem>>, vector<1x8xf32>
    %36 = vector.broadcast %35 : vector<1x8xf32> to vector<32x8xf32>
    %37 = arith.addf %34, %36 : vector<32x8xf32>
    %cst_50 = arith.constant 0.000000e+00 : f32
    %38 = vector.broadcast %cst_50 : f32 to vector<32x8xf32>
    %39 = arith.maximumf %37, %38 : vector<32x8xf32>
    %40 = vector.extract_strided_slice %39 {offsets = [0, 0], sizes = [32, 4], strides = [1, 1]} : vector<32x8xf32> to vector<32x4xf32>
    %41 = vector.extract_strided_slice %39 {offsets = [0, 4], sizes = [32, 4], strides = [1, 1]} : vector<32x8xf32> to vector<32x4xf32>
    %42 = arith.addf %40, %41 : vector<32x4xf32>
    %cst_51 = arith.constant 5.000000e-01 : f32
    %43 = vector.broadcast %cst_51 : f32 to vector<32x4xf32>
    %44 = arith.mulf %42, %43 : vector<32x4xf32>
    %c0_52 = arith.constant 0 : index
    %c0_53 = arith.constant 0 : index
    %45 = vector.load %arg9[%c0_52, %c0_53] : memref<32x4xf32, #tpu.memory_space<vmem>>, vector<32x4xf32>
    tpu.vector_store %arg9[%c0_52, %c0_53], %44 {strides = array<i32>} : memref<32x4xf32, #tpu.memory_space<vmem>>, vector<32x4xf32>,
    %c0_54 = arith.constant 0 : index
    %c0_55 = arith.constant 0 : index
    %46 = tpu.strided_load %arg9[%c0_54, %c0_55] {strides = array<i32: 2, 1>} : memref<32x4xf32, #tpu.memory_space<vmem>>, vector<16x4xf32>
    %c1_56 = arith.constant 1 : index
    %c0_57 = arith.constant 0 : index
    %47 = tpu.strided_load %arg9[%c1_56, %c0_57] {strides = array<i32: 2, 1>} : memref<32x4xf32, #tpu.memory_space<vmem>>, vector<16x4xf32>
    %48 = arith.maximumf %46, %47 : vector<16x4xf32>
    %49 = vector.extract_strided_slice %48 {offsets = [0, 0], sizes = [16, 2], strides = [1, 1]} : vector<16x4xf32> to vector<16x2xf32>
    %50 = vector.extract_strided_slice %48 {offsets = [0, 2], sizes = [16, 2], strides = [1, 1]} : vector<16x4xf32> to vector<16x2xf32>
    %51 = arith.maximumf %49, %50 : vector<16x2xf32>
    %cst_58 = arith.constant 0.000000e+00 : f32
    %52 = vector.broadcast %cst_58 : f32 to vector<16x10xf32>
    %c0_59 = arith.constant 0 : index
    %c0_60 = arith.constant 0 : index
    %53 = vector.load %arg10[%c0_59, %c0_60] : memref<16x10xf32, #tpu.memory_space<vmem>>, vector<16x10xf32>
    tpu.vector_store %arg10[%c0_59, %c0_60], %52 {strides = array<i32>} : memref<16x10xf32, #tpu.memory_space<vmem>>, vector<16x10xf32>,
    %54 = vector.extract_strided_slice %51 {offsets = [0, 0], sizes = [6, 2], strides = [1, 1]} : vector<16x2xf32> to vector<6x2xf32>
    %c2_61 = arith.constant 2 : index
    %c0_62 = arith.constant 0 : index
    %55 = vector.load %arg10[%c2_61, %c0_62] : memref<16x10xf32, #tpu.memory_space<vmem>>, vector<6x2xf32>
    tpu.vector_store %arg10[%c2_61, %c0_62], %54 {strides = array<i32>} : memref<16x10xf32, #tpu.memory_space<vmem>>, vector<6x2xf32>,
    %56 = vector.extract_strided_slice %51 {offsets = [0, 0], sizes = [7, 2], strides = [1, 1]} : vector<16x2xf32> to vector<7x2xf32>
    %c1_63 = arith.constant 1 : index
    %c2_64 = arith.constant 2 : index
    %57 = vector.load %arg10[%c1_63, %c2_64] : memref<16x10xf32, #tpu.memory_space<vmem>>, vector<7x2xf32>
    tpu.vector_store %arg10[%c1_63, %c2_64], %56 {strides = array<i32>} : memref<16x10xf32, #tpu.memory_space<vmem>>, vector<7x2xf32>,
    %58 = vector.extract_strided_slice %51 {offsets = [0, 0], sizes = [8, 2], strides = [1, 1]} : vector<16x2xf32> to vector<8x2xf32>
    %c0_65 = arith.constant 0 : index
    %c4 = arith.constant 4 : index
    %59 = vector.load %arg10[%c0_65, %c4] : memref<16x10xf32, #tpu.memory_space<vmem>>, vector<8x2xf32>
    tpu.vector_store %arg10[%c0_65, %c4], %58 {strides = array<i32>} : memref<16x10xf32, #tpu.memory_space<vmem>>, vector<8x2xf32>,
    %60 = vector.extract_strided_slice %51 {offsets = [1, 0], sizes = [7, 2], strides = [1, 1]} : vector<16x2xf32> to vector<7x2xf32>
    %c0_66 = arith.constant 0 : index
    %c6 = arith.constant 6 : index
    %61 = vector.load %arg10[%c0_66, %c6] : memref<16x10xf32, #tpu.memory_space<vmem>>, vector<7x2xf32>
    tpu.vector_store %arg10[%c0_66, %c6], %60 {strides = array<i32>} : memref<16x10xf32, #tpu.memory_space<vmem>>, vector<7x2xf32>,
    %62 = vector.extract_strided_slice %51 {offsets = [2, 0], sizes = [6, 2], strides = [1, 1]} : vector<16x2xf32> to vector<6x2xf32>
    %c0_67 = arith.constant 0 : index
    %c8_68 = arith.constant 8 : index
    %63 = vector.load %arg10[%c0_67, %c8_68] : memref<16x10xf32, #tpu.memory_space<vmem>>, vector<6x2xf32>
    tpu.vector_store %arg10[%c0_67, %c8_68], %62 {strides = array<i32>} : memref<16x10xf32, #tpu.memory_space<vmem>>, vector<6x2xf32>,
    %64 = vector.extract_strided_slice %51 {offsets = [8, 0], sizes = [6, 2], strides = [1, 1]} : vector<16x2xf32> to vector<6x2xf32>
    %c10 = arith.constant 10 : index
    %c0_69 = arith.constant 0 : index
    %65 = vector.load %arg10[%c10, %c0_69] : memref<16x10xf32, #tpu.memory_space<vmem>>, vector<6x2xf32>
    tpu.vector_store %arg10[%c10, %c0_69], %64 {strides = array<i32>} : memref<16x10xf32, #tpu.memory_space<vmem>>, vector<6x2xf32>,
    %66 = vector.extract_strided_slice %51 {offsets = [8, 0], sizes = [7, 2], strides = [1, 1]} : vector<16x2xf32> to vector<7x2xf32>
    %c9 = arith.constant 9 : index
    %c2_70 = arith.constant 2 : index
    %67 = vector.load %arg10[%c9, %c2_70] : memref<16x10xf32, #tpu.memory_space<vmem>>, vector<7x2xf32>
    tpu.vector_store %arg10[%c9, %c2_70], %66 {strides = array<i32>} : memref<16x10xf32, #tpu.memory_space<vmem>>, vector<7x2xf32>,
    %68 = vector.extract_strided_slice %51 {offsets = [8, 0], sizes = [8, 2], strides = [1, 1]} : vector<16x2xf32> to vector<8x2xf32>
    %c8_71 = arith.constant 8 : index
    %c4_72 = arith.constant 4 : index
    %69 = vector.load %arg10[%c8_71, %c4_72] : memref<16x10xf32, #tpu.memory_space<vmem>>, vector<8x2xf32>
    tpu.vector_store %arg10[%c8_71, %c4_72], %68 {strides = array<i32>} : memref<16x10xf32, #tpu.memory_space<vmem>>, vector<8x2xf32>,
    %70 = vector.extract_strided_slice %51 {offsets = [9, 0], sizes = [7, 2], strides = [1, 1]} : vector<16x2xf32> to vector<7x2xf32>
    %c8_73 = arith.constant 8 : index
    %c6_74 = arith.constant 6 : index
    %71 = vector.load %arg10[%c8_73, %c6_74] : memref<16x10xf32, #tpu.memory_space<vmem>>, vector<7x2xf32>
    tpu.vector_store %arg10[%c8_73, %c6_74], %70 {strides = array<i32>} : memref<16x10xf32, #tpu.memory_space<vmem>>, vector<7x2xf32>,
    %72 = vector.extract_strided_slice %51 {offsets = [10, 0], sizes = [6, 2], strides = [1, 1]} : vector<16x2xf32> to vector<6x2xf32>
    %c8_75 = arith.constant 8 : index
    %c8_76 = arith.constant 8 : index
    %73 = vector.load %arg10[%c8_75, %c8_76] : memref<16x10xf32, #tpu.memory_space<vmem>>, vector<6x2xf32>
    tpu.vector_store %arg10[%c8_75, %c8_76], %72 {strides = array<i32>} : memref<16x10xf32, #tpu.memory_space<vmem>>, vector<6x2xf32>,
    %c0_77 = arith.constant 0 : index
    %c0_78 = arith.constant 0 : index
    %74 = vector.load %arg10[%c0_77, %c0_78] : memref<16x10xf32, #tpu.memory_space<vmem>>, vector<16x10xf32>
    %c0_79 = arith.constant 0 : index
    %c0_80 = arith.constant 0 : index
    %75 = vector.load %arg3[%c0_79, %c0_80] : memref<10x16xf32, #tpu.memory_space<vmem>>, vector<10x16xf32>
    %cst_81 = arith.constant dense<0.000000e+00> : vector<16x16xf32>
    %76 = tpu.matmul %74, %75, %cst_81 {dimension_numbers = #tpu.dot_dimension_numbers<[1], [0], [0], [1], [0, 0, 1, 1], [], []>, precision = #tpu.contract_precision<fp32>} : vector<16x10xf32>, vector<10x16xf32>, vector<16x16xf32> -> vector<16x16xf32>
    %c0_82 = arith.constant 0 : index
    %c0_83 = arith.constant 0 : index
    %77 = vector.load %arg4[%c0_82, %c0_83] : memref<1x16xf32, #tpu.memory_space<vmem>>, vector<1x16xf32>
    %78 = vector.broadcast %77 : vector<1x16xf32> to vector<16x16xf32>
    %79 = arith.addf %76, %78 : vector<16x16xf32>
    %cst_84 = arith.constant 0.000000e+00 : f32
    %80 = vector.broadcast %cst_84 : f32 to vector<16x16xf32>
    %81 = arith.maximumf %79, %80 : vector<16x16xf32>
    %82 = vector.extract_strided_slice %81 {offsets = [0, 0], sizes = [16, 8], strides = [1, 1]} : vector<16x16xf32> to vector<16x8xf32>
    %83 = vector.extract_strided_slice %81 {offsets = [0, 8], sizes = [16, 8], strides = [1, 1]} : vector<16x16xf32> to vector<16x8xf32>
    %84 = arith.addf %82, %83 : vector<16x8xf32>
    %cst_85 = arith.constant 5.000000e-01 : f32
    %85 = vector.broadcast %cst_85 : f32 to vector<16x8xf32>
    %86 = arith.mulf %84, %85 : vector<16x8xf32>
    %c0_86 = arith.constant 0 : index
    %c0_87 = arith.constant 0 : index
    %87 = vector.load %arg11[%c0_86, %c0_87] : memref<16x8xf32, #tpu.memory_space<vmem>>, vector<16x8xf32>
    tpu.vector_store %arg11[%c0_86, %c0_87], %86 {strides = array<i32>} : memref<16x8xf32, #tpu.memory_space<vmem>>, vector<16x8xf32>,
    %c0_88 = arith.constant 0 : index
    %c0_89 = arith.constant 0 : index
    %88 = tpu.strided_load %arg11[%c0_88, %c0_89] {strides = array<i32: 2, 1>} : memref<16x8xf32, #tpu.memory_space<vmem>>, vector<8x8xf32>
    %c1_90 = arith.constant 1 : index
    %c0_91 = arith.constant 0 : index
    %89 = tpu.strided_load %arg11[%c1_90, %c0_91] {strides = array<i32: 2, 1>} : memref<16x8xf32, #tpu.memory_space<vmem>>, vector<8x8xf32>
    %90 = arith.maximumf %88, %89 : vector<8x8xf32>
    %91 = vector.extract_strided_slice %90 {offsets = [0, 0], sizes = [8, 4], strides = [1, 1]} : vector<8x8xf32> to vector<8x4xf32>
    %92 = vector.extract_strided_slice %90 {offsets = [0, 4], sizes = [8, 4], strides = [1, 1]} : vector<8x8xf32> to vector<8x4xf32>
    %93 = arith.maximumf %91, %92 : vector<8x4xf32>
    %94 = vector.extract_strided_slice %93 {offsets = [0, 0], sizes = [1, 4], strides = [1, 1]} : vector<8x4xf32> to vector<1x4xf32>
    %c0_92 = arith.constant 0 : index
    %c0_93 = arith.constant 0 : index
    %95 = vector.load %arg12[%c0_92, %c0_93] : memref<2x16xf32, #tpu.memory_space<vmem>>, vector<1x4xf32>
    tpu.vector_store %arg12[%c0_92, %c0_93], %94 {strides = array<i32>} : memref<2x16xf32, #tpu.memory_space<vmem>>, vector<1x4xf32>,
    %96 = vector.extract_strided_slice %93 {offsets = [1, 0], sizes = [1, 4], strides = [1, 1]} : vector<8x4xf32> to vector<1x4xf32>
    %c0_94 = arith.constant 0 : index
    %c4_95 = arith.constant 4 : index
    %97 = vector.load %arg12[%c0_94, %c4_95] : memref<2x16xf32, #tpu.memory_space<vmem>>, vector<1x4xf32>
    tpu.vector_store %arg12[%c0_94, %c4_95], %96 {strides = array<i32>} : memref<2x16xf32, #tpu.memory_space<vmem>>, vector<1x4xf32>,
    %98 = vector.extract_strided_slice %93 {offsets = [2, 0], sizes = [1, 4], strides = [1, 1]} : vector<8x4xf32> to vector<1x4xf32>
    %c0_96 = arith.constant 0 : index
    %c8_97 = arith.constant 8 : index
    %99 = vector.load %arg12[%c0_96, %c8_97] : memref<2x16xf32, #tpu.memory_space<vmem>>, vector<1x4xf32>
    tpu.vector_store %arg12[%c0_96, %c8_97], %98 {strides = array<i32>} : memref<2x16xf32, #tpu.memory_space<vmem>>, vector<1x4xf32>,
    %100 = vector.extract_strided_slice %93 {offsets = [3, 0], sizes = [1, 4], strides = [1, 1]} : vector<8x4xf32> to vector<1x4xf32>
    %c0_98 = arith.constant 0 : index
    %c12 = arith.constant 12 : index
    %101 = vector.load %arg12[%c0_98, %c12] : memref<2x16xf32, #tpu.memory_space<vmem>>, vector<1x4xf32>
    tpu.vector_store %arg12[%c0_98, %c12], %100 {strides = array<i32>} : memref<2x16xf32, #tpu.memory_space<vmem>>, vector<1x4xf32>,
    %102 = vector.extract_strided_slice %93 {offsets = [4, 0], sizes = [1, 4], strides = [1, 1]} : vector<8x4xf32> to vector<1x4xf32>
    %c1_99 = arith.constant 1 : index
    %c0_100 = arith.constant 0 : index
    %103 = vector.load %arg12[%c1_99, %c0_100] : memref<2x16xf32, #tpu.memory_space<vmem>>, vector<1x4xf32>
    tpu.vector_store %arg12[%c1_99, %c0_100], %102 {strides = array<i32>} : memref<2x16xf32, #tpu.memory_space<vmem>>, vector<1x4xf32>,
    %104 = vector.extract_strided_slice %93 {offsets = [5, 0], sizes = [1, 4], strides = [1, 1]} : vector<8x4xf32> to vector<1x4xf32>
    %c1_101 = arith.constant 1 : index
    %c4_102 = arith.constant 4 : index
    %105 = vector.load %arg12[%c1_101, %c4_102] : memref<2x16xf32, #tpu.memory_space<vmem>>, vector<1x4xf32>
    tpu.vector_store %arg12[%c1_101, %c4_102], %104 {strides = array<i32>} : memref<2x16xf32, #tpu.memory_space<vmem>>, vector<1x4xf32>,
    %106 = vector.extract_strided_slice %93 {offsets = [6, 0], sizes = [1, 4], strides = [1, 1]} : vector<8x4xf32> to vector<1x4xf32>
    %c1_103 = arith.constant 1 : index
    %c8_104 = arith.constant 8 : index
    %107 = vector.load %arg12[%c1_103, %c8_104] : memref<2x16xf32, #tpu.memory_space<vmem>>, vector<1x4xf32>
    tpu.vector_store %arg12[%c1_103, %c8_104], %106 {strides = array<i32>} : memref<2x16xf32, #tpu.memory_space<vmem>>, vector<1x4xf32>,
    %108 = vector.extract_strided_slice %93 {offsets = [7, 0], sizes = [1, 4], strides = [1, 1]} : vector<8x4xf32> to vector<1x4xf32>
    %c1_105 = arith.constant 1 : index
    %c12_106 = arith.constant 12 : index
    %109 = vector.load %arg12[%c1_105, %c12_106] : memref<2x16xf32, #tpu.memory_space<vmem>>, vector<1x4xf32>
    tpu.vector_store %arg12[%c1_105, %c12_106], %108 {strides = array<i32>} : memref<2x16xf32, #tpu.memory_space<vmem>>, vector<1x4xf32>,
    %c0_107 = arith.constant 0 : index
    %c0_108 = arith.constant 0 : index
    %110 = vector.load %arg12[%c0_107, %c0_108] : memref<2x16xf32, #tpu.memory_space<vmem>>, vector<2x16xf32>
    %c0_109 = arith.constant 0 : index
    %c0_110 = arith.constant 0 : index
    %111 = vector.load %arg5[%c0_109, %c0_110] : memref<16x2xf32, #tpu.memory_space<vmem>>, vector<16x2xf32>
    %cst_111 = arith.constant dense<0.000000e+00> : vector<2x2xf32>
    %112 = tpu.matmul %110, %111, %cst_111 {dimension_numbers = #tpu.dot_dimension_numbers<[1], [0], [0], [1], [0, 0, 1, 1], [], []>, precision = #tpu.contract_precision<fp32>} : vector<2x16xf32>, vector<16x2xf32>, vector<2x2xf32> -> vector<2x2xf32>
    %c0_112 = arith.constant 0 : index
    %c0_113 = arith.constant 0 : index
    %113 = vector.load %arg6[%c0_112, %c0_113] : memref<1x2xf32, #tpu.memory_space<vmem>>, vector<1x2xf32>
    %114 = vector.broadcast %113 : vector<1x2xf32> to vector<2x2xf32>
    %115 = arith.addf %112, %114 : vector<2x2xf32>
    %cst_114 = arith.constant dense<0xFF800000> : vector<2xf32>
    %116 = vector.multi_reduction <maximumf>, %115, %cst_114 [1] : vector<2x2xf32> to vector<2xf32>
    %117 = vector.shape_cast %116 : vector<2xf32> to vector<2x1xf32>
    %118 = vector.broadcast %117 : vector<2x1xf32> to vector<2x2xf32>
    %119 = arith.subf %115, %118 : vector<2x2xf32>
    %120 = math.exp %119 : vector<2x2xf32>
    %cst_115 = arith.constant dense<0.000000e+00> : vector<2xf32>
    %121 = vector.multi_reduction <add>, %120, %cst_115 [1] : vector<2x2xf32> to vector<2xf32>
    %122 = vector.shape_cast %121 : vector<2xf32> to vector<2x1xf32>
    %123 = vector.broadcast %122 : vector<2x1xf32> to vector<2x2xf32>
    %124 = arith.divf %120, %123 : vector<2x2xf32>
    %c0_116 = arith.constant 0 : index
    %c0_117 = arith.constant 0 : index
    %125 = vector.load %arg7[%c0_116, %c0_117] : memref<2x2xf32, #tpu.memory_space<vmem>>, vector<2x2xf32>
    tpu.vector_store %arg7[%c0_116, %c0_117], %124 {strides = array<i32>} : memref<2x2xf32, #tpu.memory_space<vmem>>, vector<2x2xf32>,
    return
  }
}

</mosaic_0001>

<llo_original>
// kernel: discriminator_forward.1
$region0: #{discriminator_forward.1}
  #allocation0 [shape = 'u32[]', space=smem, size = 0x4, offset = 0x4, fixed_abs, tag = 'smem constant byte address 0x4 - core index']
  #allocation1 [shape = 'u32[144,128]{1,0:T(1,128)}', space=vmem, size = 0x12000, scoped, tag = 'internal scratch']
  #allocation2 [shape = 'f32[32,40]{1,0:T(8,128)}', space=vmem, size = 0x4000, scoped, tag = 'scratch operand']
  #allocation3 [shape = 'f32[32,4]{1,0:T(8,128)}', space=vmem, size = 0x4000, scoped, tag = 'scratch operand']
  #allocation4 [shape = 'f32[16,10]{1,0:T(8,128)}', space=vmem, size = 0x2000, scoped, tag = 'scratch operand']
  #allocation5 [shape = 'f32[16,8]{1,0:T(8,128)}', space=vmem, size = 0x2000, scoped, tag = 'scratch operand']
  #allocation6 [shape = 'f32[2,16]{1,0:T(2,128)}', space=vmem, size = 0x400, scoped, tag = 'scratch operand']
  %s0 = inlined_call_operand.vmem [shape: f32[2,16,8], index: 0, kind: input, shape index: {}]
  %s1 = inlined_call_operand.vmem [shape: f32[40,8], index: 1, kind: input, shape index: {}]
  %s2 = inlined_call_operand.vmem [shape: f32[1,8], index: 2, kind: input, shape index: {}]
  %s3 = inlined_call_operand.vmem [shape: f32[10,16], index: 3, kind: input, shape index: {}]
  %s4 = inlined_call_operand.vmem [shape: f32[1,16], index: 4, kind: input, shape index: {}]
  %s5 = inlined_call_operand.vmem [shape: f32[16,2], index: 5, kind: input, shape index: {}]
  %s6 = inlined_call_operand.vmem [shape: f32[1,2], index: 6, kind: input, shape index: {}]
  %s7 = inlined_call_operand.vmem [shape: f32[2,2], index: 7, kind: output, shape index: {}]
  %s8 = sld [smem:[#allocation0]]
  $region38: #{discriminator_forward.1} parent=0
    _
  %s10 = ssub.s32 1, %s8
  %s11 = scalar_select 0, %s10, %s8
  // Predicated region
  $region2: #{discriminator_forward.1} parent=0 // pred_check
    _
  $region3: #{discriminator_forward.1} parent=0 // pred_check_branch
    %13 = sbr.rel (0) target = $region5
  $region4: #{discriminator_forward.1} parent=0 // pred_region
    _
  $region5: #{discriminator_forward.1} parent=0 // pred_fallthru
    _
  // Predicated region
  $region6: #{discriminator_forward.1} parent=0 // pred_check
    _
  $region7: #{discriminator_forward.1} parent=0 // pred_check_branch
    %15 = sbr.rel (0) target = $region9
  $region8: #{discriminator_forward.1} parent=0 // pred_region
    _
  $region9: #{discriminator_forward.1} parent=0 // pred_fallthru
    _
  // Predicated region
  $region10: #{discriminator_forward.1} parent=0 // pred_check
    _
  $region11: #{discriminator_forward.1} parent=0 // pred_check_branch
    %17 = sbr.rel (0) target = $region13
  $region12: #{discriminator_forward.1} parent=0 // pred_region
    _
  $region13: #{discriminator_forward.1} parent=0 // pred_fallthru
    _
  // Predicated region
  $region14: #{discriminator_forward.1} parent=0 // pred_check
    _
  $region15: #{discriminator_forward.1} parent=0 // pred_check_branch
    %19 = sbr.rel (0) target = $region17
  $region16: #{discriminator_forward.1} parent=0 // pred_region
    _
  $region17: #{discriminator_forward.1} parent=0 // pred_fallthru
    _
  // Predicated region
  $region18: #{discriminator_forward.1} parent=0 // pred_check
    _
  $region19: #{discriminator_forward.1} parent=0 // pred_check_branch
    %21 = sbr.rel (0) target = $region21
  $region20: #{discriminator_forward.1} parent=0 // pred_region
    _
  $region21: #{discriminator_forward.1} parent=0 // pred_fallthru
    _
  // Predicated region
  $region22: #{discriminator_forward.1} parent=0 // pred_check
    _
  $region23: #{discriminator_forward.1} parent=0 // pred_check_branch
    %23 = sbr.rel (0) target = $region25
  $region24: #{discriminator_forward.1} parent=0 // pred_region
    _
  $region25: #{discriminator_forward.1} parent=0 // pred_fallthru
    _
  // Predicated region
  $region26: #{discriminator_forward.1} parent=0 // pred_check
    _
  $region27: #{discriminator_forward.1} parent=0 // pred_check_branch
    %25 = sbr.rel (0) target = $region29
  $region28: #{discriminator_forward.1} parent=0 // pred_region
    _
  $region29: #{discriminator_forward.1} parent=0 // pred_fallthru
    _
  %vm26 = vcmask 326656
  %27 = vst.msk [vmem:[#allocation2] sm:$0xff] %vm26, 0.0
  %28 = vst.msk [vmem:[#allocation2 + $0x8] sm:$0xff] %vm26, 0.0
  %29 = vst.msk [vmem:[#allocation2 + $0x10] sm:$0xff] %vm26, 0.0
  %30 = vst.msk [vmem:[#allocation2 + $0x18] sm:$0xff] %vm26, 0.0
  %v31 = vld [vmem:[%s0] sm:$0xff]
  %v32 = vld [vmem:[%s0 + $0x8] sm:$0x3f]
  %vm33 = vcmask 64512
  %34 = vst.msk [vmem:[#allocation2 + $0x2] sm:$0xff] %vm33, %v31
  %vm35 = vcmask 62464
  %36 = vst.msk [vmem:[#allocation2 + $0xa] sm:$0x3f] %vm35, %v32
  %v37 = vld [vmem:[%s0] sm:$0xff]
  %v38 = vld [vmem:[%s0 + $0x8] sm:$0x7f]
  %41 = vrot.lane.b32.xlu0 %v37, 8
  %v42 = vpop.permute.xlu0 %41
  %43 = vrot.lane.b32.xlu0 %v38, 8
  %v44 = vpop.permute.xlu0 %43
  %vm47 = vcmask 130112
  %48 = vst.msk [vmem:[#allocation2 + $0x1] sm:$0xff] %vm47, %v42
  %vm49 = vcmask 129088
  %50 = vst.msk [vmem:[#allocation2 + $0x9] sm:$0x7f] %vm49, %v44
  %v51 = vld [vmem:[%s0] sm:$0xff]
  %v52 = vld [vmem:[%s0 + $0x8] sm:$0xff]
  %55 = vrot.lane.b32.xlu0 %v51, 16
  %v56 = vpop.permute.xlu0 %55
  %57 = vrot.lane.b32.xlu0 %v52, 16
  %v58 = vpop.permute.xlu0 %57
  %vm61 = vcmask 195712
  %62 = vst.msk [vmem:[#allocation2] sm:$0xff] %vm61, %v56
  %63 = vst.msk [vmem:[#allocation2 + $0x8] sm:$0xff] %vm61, %v58
  %v64 = vld [vmem:[%s0 + $0x1] sm:$0xff]
  %v65 = vld [vmem:[%s0 + $0x9] sm:$0x7f]
  %68 = vrot.lane.b32.xlu0 %v64, 24
  %v69 = vpop.permute.xlu0 %68
  %70 = vrot.lane.b32.xlu0 %v65, 24
  %v71 = vpop.permute.xlu0 %70
  %vm74 = vcmask 261312
  %75 = vst.msk [vmem:[#allocation2] sm:$0xff] %vm74, %v69
  %vm76 = vcmask 260288
  %77 = vst.msk [vmem:[#allocation2 + $0x8] sm:$0x7f] %vm76, %v71
  %v78 = vld [vmem:[%s0 + $0x2] sm:$0xff]
  %v79 = vld [vmem:[%s0 + $0xa] sm:$0x3f]
  %82 = vrot.lane.b32.xlu0 %v78, 32
  %v83 = vpop.permute.xlu0 %82
  %84 = vrot.lane.b32.xlu0 %v79, 32
  %v85 = vpop.permute.xlu0 %84
  %vm88 = vcmask 326912
  %89 = vst.msk [vmem:[#allocation2] sm:$0xff] %vm88, %v83
  %vm90 = vcmask 324864
  %91 = vst.msk [vmem:[#allocation2 + $0x8] sm:$0x3f] %vm90, %v85
  %s92 = scalar_lea.vmem %s0, 16
  %v93 = vld [vmem:[%s92] sm:$0xff]
  %v94 = vld [vmem:[%s92 + $0x8] sm:$0x3f]
  %95 = vst.msk [vmem:[#allocation2 + $0x12] sm:$0xff] %vm33, %v93
  %96 = vst.msk [vmem:[#allocation2 + $0x1a] sm:$0x3f] %vm35, %v94
  %v97 = vld [vmem:[%s92] sm:$0xff]
  %v98 = vld [vmem:[%s92 + $0x8] sm:$0x7f]
  %101 = vrot.lane.b32.xlu0 %v97, 8
  %v102 = vpop.permute.xlu0 %101
  %103 = vrot.lane.b32.xlu0 %v98, 8
  %v104 = vpop.permute.xlu0 %103
  %107 = vst.msk [vmem:[#allocation2 + $0x11] sm:$0xff] %vm47, %v102
  %108 = vst.msk [vmem:[#allocation2 + $0x19] sm:$0x7f] %vm49, %v104
  %v109 = vld [vmem:[%s92] sm:$0xff]
  %v110 = vld [vmem:[%s92 + $0x8] sm:$0xff]
  %113 = vrot.lane.b32.xlu0 %v109, 16
  %v114 = vpop.permute.xlu0 %113
  %115 = vrot.lane.b32.xlu0 %v110, 16
  %v116 = vpop.permute.xlu0 %115
  %119 = vst.msk [vmem:[#allocation2 + $0x10] sm:$0xff] %vm61, %v114
  %120 = vst.msk [vmem:[#allocation2 + $0x18] sm:$0xff] %vm61, %v116
  %v121 = vld [vmem:[%s92 + $0x1] sm:$0xff]
  %v122 = vld [vmem:[%s92 + $0x9] sm:$0x7f]
  %125 = vrot.lane.b32.xlu0 %v121, 24
  %v126 = vpop.permute.xlu0 %125
  %127 = vrot.lane.b32.xlu0 %v122, 24
  %v128 = vpop.permute.xlu0 %127
  %131 = vst.msk [vmem:[#allocation2 + $0x10] sm:$0xff] %vm74, %v126
  %132 = vst.msk [vmem:[#allocation2 + $0x18] sm:$0x7f] %vm76, %v128
  %v133 = vld [vmem:[%s92 + $0x2] sm:$0xff]
  %v134 = vld [vmem:[%s92 + $0xa] sm:$0x3f]
  %137 = vrot.lane.b32.xlu0 %v133, 32
  %v138 = vpop.permute.xlu0 %137
  %139 = vrot.lane.b32.xlu0 %v134, 32
  %v140 = vpop.permute.xlu0 %139
  %143 = vst.msk [vmem:[#allocation2 + $0x10] sm:$0xff] %vm88, %v138
  %144 = vst.msk [vmem:[#allocation2 + $0x18] sm:$0x3f] %vm90, %v140
  %v145 = vld [vmem:[#allocation2] sm:$0xff]
  %v146 = vld [vmem:[#allocation2 + $0x8] sm:$0xff]
  %v147 = vld [vmem:[#allocation2 + $0x10] sm:$0xff]
  %v148 = vld [vmem:[#allocation2 + $0x18] sm:$0xff]
  %v149 = vld [vmem:[%s1] sm:$0xff]
  %v150 = vld [vmem:[%s1 + $0x8] sm:$0xff]
  %v151 = vld [vmem:[%s1 + $0x10] sm:$0xff]
  %v152 = vld [vmem:[%s1 + $0x18] sm:$0xff]
  %v153 = vld [vmem:[%s1 + $0x20] sm:$0xff]
  %v154 = vld [vmem:[%s2] sm:$0x1]
  %v156 = vlaneseq
  %v157 = vshrl.u32 %v156, 7
  %v158 = vsub.s32 0, %v157
  %v159 = vrot.slane %v154, %v158
  %v162 = vsel %vm26, %v145, 0
  %v165 = vsel %vm26, %v146, 0
  %v168 = vsel %vm26, %v147, 0
  %v171 = vsel %vm26, %v148, 0
  %173 = vmatprep.subr.mxu0 0.0
  %v174 = vand.u32 %v149, 4294901760
  %175 = vmatpush1.msra.mxu0 %v174
  %176 = vmatprep.subr.mxu0 0.0
  %v177 = vand.u32 %v150, 4294901760
  %178 = vmatpush1.msra.mxu0 %v177
  %179 = vmatprep.subr.mxu0 0.0
  %v180 = vand.u32 %v151, 4294901760
  %181 = vmatpush1.msra.mxu0 %v180
  %182 = vmatprep.subr.mxu0 0.0
  %v183 = vand.u32 %v152, 4294901760
  %184 = vmatpush1.msra.mxu0 %v183
  %185 = vmatprep.subr.mxu0 0.0
  %v186 = vand.u32 %v153, 4294901760
  %187 = vmatpush1.msra.mxu0 %v186
  %188 = vmatprep.subr.mxu0 0.0
  %189 = vmatpush1.msra.mxu0 0.0
  %190 = vmatprep.subr.mxu0 0.0
  %191 = vmatpush1.msra.mxu0 0.0
  %192 = vmatprep.subr.mxu0 0.0
  %193 = vmatpush1.msra.mxu0 0.0
  %194 = vmatprep.subr.mxu0 0.0
  %195 = vmatpush1.msra.mxu0 0.0
  %196 = vmatprep.subr.mxu0 0.0
  %197 = vmatpush1.msra.mxu0 0.0
  %198 = vmatprep.subr.mxu0 0.0
  %199 = vmatpush1.msra.mxu0 0.0
  %200 = vmatprep.subr.mxu0 0.0
  %201 = vmatpush1.msra.mxu0 0.0
  %202 = vmatprep.subr.mxu0 0.0
  %203 = vmatpush1.msra.mxu0 0.0
  %204 = vmatprep.subr.mxu0 0.0
  %205 = vmatpush1.msra.mxu0 0.0
  %206 = vmatprep.subr.mxu0 0.0
  %207 = vmatpush1.msra.mxu0 0.0
  %208 = vmatprep.subr.mxu0 0.0
  %209 = vmatpush1.msra.mxu0 0.0
  %210 = vmatprep.subr.mxu0 0.0
  %211 = vmatpush1.msra.mxu0 0.0
  %212 = vmatprep.subr.mxu0 0.0
  %213 = vmatpush1.msra.mxu0 0.0
  %214 = vmatprep.subr.mxu0 0.0
  %215 = vmatpush1.msra.mxu0 0.0
  %216 = vmatprep.subr.mxu0 0.0
  %217 = vmatpush1.msra.mxu0 0.0
  %218 = vmatprep.subr.mxu0 0.0
  %219 = vmatpush1.msra.mxu0 0.0
  %220 = vmatprep.subr.mxu0 0.0
  %221 = vmatpush1.msra.mxu0 0.0
  %222 = vmatprep.subr.mxu0 0.0
  %223 = vmatpush1.msra.mxu0 0.0
  %224 = vmatprep.subr.mxu0 0.0
  %225 = vmatpush1.msra.mxu0 0.0
  %226 = vmatprep.subr.mxu0 0.0
  %227 = vmatpush1.msra.mxu0 0.0
  %228 = vmatprep.subr.mxu0 0.0
  %229 = vmatpush1.msra.mxu0 0.0
  %230 = vmatprep.subr.mxu0 0.0
  %231 = vmatpush1.msra.mxu0 0.0
  %232 = vmatprep.subr.mxu0 0.0
  %233 = vmatpush1.msra.mxu0 0.0
  %234 = vmatprep.subr.mxu0 0.0
  %235 = vmatpush1.msra.mxu0 0.0
  %236 = vmatprep.subr.mxu0 0.0
  %237 = vmatpush1.msra.mxu0 0.0
  %238 = vmatprep.subr.mxu0 0.0
  %239 = vmatpush1.msra.mxu0 0.0
  %240 = vmatprep.subr.mxu0 0.0
  %241 = vmatpush1.msra.mxu0 0.0
  %242 = vmatprep.mubr.f32.mxu0 0.0
  %v243 = vand.u32 %v162, 4294901760
  %v244 = vsub.f32 %v162, %v243
  %v245 = vand.u32 %v244, 4294901760
  %v246 = vsub.f32 %v244, %v245
  %v247 = vand.u32 %v246, 4294901760
  %248 = vmatmul.mubr.f32.gmra.mrb[0].mxu0 %v247
  %v249 = vpop.f32.mrb[0].mxu0
  %v250 = vadd.f32 %v159, %v249
  %v251 = vpop.f32.mrb[0].mxu0
  %252 = vmatprep.mubr.f32.mxu0 0.0
  %v253 = vand.u32 %v165, 4294901760
  %v254 = vsub.f32 %v165, %v253
  %v255 = vand.u32 %v254, 4294901760
  %v256 = vsub.f32 %v254, %v255
  %v257 = vand.u32 %v256, 4294901760
  %258 = vmatmul.mubr.f32.gmra.mrb[0].mxu0 %v257
  %v259 = vpop.f32.mrb[0].mxu0
  %v260 = vadd.f32 %v159, %v259
  %v261 = vpop.f32.mrb[0].mxu0
  %262 = vmatprep.mubr.f32.mxu0 0.0
  %v263 = vand.u32 %v168, 4294901760
  %v264 = vsub.f32 %v168, %v263
  %v265 = vand.u32 %v264, 4294901760
  %v266 = vsub.f32 %v264, %v265
  %v267 = vand.u32 %v266, 4294901760
  %268 = vmatmul.mubr.f32.gmra.mrb[0].mxu0 %v267
  %v269 = vpop.f32.mrb[0].mxu0
  %v270 = vadd.f32 %v159, %v269
  %v271 = vpop.f32.mrb[0].mxu0
  %272 = vmatprep.mubr.f32.mxu0 0.0
  %v273 = vand.u32 %v171, 4294901760
  %v274 = vsub.f32 %v171, %v273
  %v275 = vand.u32 %v274, 4294901760
  %v276 = vsub.f32 %v274, %v275
  %v277 = vand.u32 %v276, 4294901760
  %278 = vmatmul.mubr.f32.gmra.mrb[0].mxu0 %v277
  %v279 = vpop.f32.mrb[0].mxu0
  %v280 = vadd.f32 %v159, %v279
  %v281 = vpop.f32.mrb[0].mxu0
  %282 = vdwg.mxu0
  %283 = vmatprep.subr.mxu0 0.0
  %v284 = vand.u32 %v149, 4294901760
  %v285 = vsub.f32 %v149, %v284
  %v286 = vand.u32 %v285, 4294901760
  %v287 = vsub.f32 %v285, %v286
  %v288 = vand.u32 %v287, 4294901760
  %289 = vmatpush1.msra.mxu0 %v288
  %290 = vmatprep.subr.mxu0 0.0
  %v291 = vand.u32 %v150, 4294901760
  %v292 = vsub.f32 %v150, %v291
  %v293 = vand.u32 %v292, 4294901760
  %v294 = vsub.f32 %v292, %v293
  %v295 = vand.u32 %v294, 4294901760
  %296 = vmatpush1.msra.mxu0 %v295
  %297 = vmatprep.subr.mxu0 0.0
  %v298 = vand.u32 %v151, 4294901760
  %v299 = vsub.f32 %v151, %v298
  %v300 = vand.u32 %v299, 4294901760
  %v301 = vsub.f32 %v299, %v300
  %v302 = vand.u32 %v301, 4294901760
  %303 = vmatpush1.msra.mxu0 %v302
  %304 = vmatprep.subr.mxu0 0.0
  %v305 = vand.u32 %v152, 4294901760
  %v306 = vsub.f32 %v152, %v305
  %v307 = vand.u32 %v306, 4294901760
  %v308 = vsub.f32 %v306, %v307
  %v309 = vand.u32 %v308, 4294901760
  %310 = vmatpush1.msra.mxu0 %v309
  %311 = vmatprep.subr.mxu0 0.0
  %v312 = vand.u32 %v153, 4294901760
  %v313 = vsub.f32 %v153, %v312
  %v314 = vand.u32 %v313, 4294901760
  %v315 = vsub.f32 %v313, %v314
  %v316 = vand.u32 %v315, 4294901760
  %317 = vmatpush1.msra.mxu0 %v316
  %318 = vmatprep.subr.mxu0 0.0
  %319 = vmatpush1.msra.mxu0 0.0
  %320 = vmatprep.subr.mxu0 0.0
  %321 = vmatpush1.msra.mxu0 0.0
  %322 = vmatprep.subr.mxu0 0.0
  %323 = vmatpush1.msra.mxu0 0.0
  %324 = vmatprep.subr.mxu0 0.0
  %325 = vmatpush1.msra.mxu0 0.0
  %326 = vmatprep.subr.mxu0 0.0
  %327 = vmatpush1.msra.mxu0 0.0
  %328 = vmatprep.subr.mxu0 0.0
  %329 = vmatpush1.msra.mxu0 0.0
  %330 = vmatprep.subr.mxu0 0.0
  %331 = vmatpush1.msra.mxu0 0.0
  %332 = vmatprep.subr.mxu0 0.0
  %333 = vmatpush1.msra.mxu0 0.0
  %334 = vmatprep.subr.mxu0 0.0
  %335 = vmatpush1.msra.mxu0 0.0
  %336 = vmatprep.subr.mxu0 0.0
  %337 = vmatpush1.msra.mxu0 0.0
  %338 = vmatprep.subr.mxu0 0.0
  %339 = vmatpush1.msra.mxu0 0.0
  %340 = vmatprep.subr.mxu0 0.0
  %341 = vmatpush1.msra.mxu0 0.0
  %342 = vmatprep.subr.mxu0 0.0
  %343 = vmatpush1.msra.mxu0 0.0
  %344 = vmatprep.subr.mxu0 0.0
  %345 = vmatpush1.msra.mxu0 0.0
  %346 = vmatprep.subr.mxu0 0.0
  %347 = vmatpush1.msra.mxu0 0.0
  %348 = vmatprep.subr.mxu0 0.0
  %349 = vmatpush1.msra.mxu0 0.0
  %350 = vmatprep.subr.mxu0 0.0
  %351 = vmatpush1.msra.mxu0 0.0
  %352 = vmatprep.subr.mxu0 0.0
  %353 = vmatpush1.msra.mxu0 0.0
  %354 = vmatprep.subr.mxu0 0.0
  %355 = vmatpush1.msra.mxu0 0.0
  %356 = vmatprep.subr.mxu0 0.0
  %357 = vmatpush1.msra.mxu0 0.0
  %358 = vmatprep.subr.mxu0 0.0
  %359 = vmatpush1.msra.mxu0 0.0
  %360 = vmatprep.subr.mxu0 0.0
  %361 = vmatpush1.msra.mxu0 0.0
  %362 = vmatprep.subr.mxu0 0.0
  %363 = vmatpush1.msra.mxu0 0.0
  %364 = vmatprep.subr.mxu0 0.0
  %365 = vmatpush1.msra.mxu0 0.0
  %366 = vmatprep.subr.mxu0 0.0
  %367 = vmatpush1.msra.mxu0 0.0
  %368 = vmatprep.subr.mxu0 0.0
  %369 = vmatpush1.msra.mxu0 0.0
  %370 = vmatprep.subr.mxu0 0.0
  %371 = vmatpush1.msra.mxu0 0.0
  %372 = vmatprep.mubr.f32.mxu0 0.0
  %v373 = vand.u32 %v162, 4294901760
  %374 = vmatmul.mubr.f32.gmra.mrb[0].mxu0 %v373
  %v375 = vpop.f32.mrb[0].mxu0
  %v376 = vadd.f32 %v250, %v375
  %v377 = vpop.f32.mrb[0].mxu0
  %378 = vmatprep.mubr.f32.mxu0 0.0
  %v379 = vand.u32 %v165, 4294901760
  %380 = vmatmul.mubr.f32.gmra.mrb[0].mxu0 %v379
  %v381 = vpop.f32.mrb[0].mxu0
  %v382 = vadd.f32 %v260, %v381
  %v383 = vpop.f32.mrb[0].mxu0
  %384 = vmatprep.mubr.f32.mxu0 0.0
  %v385 = vand.u32 %v168, 4294901760
  %386 = vmatmul.mubr.f32.gmra.mrb[0].mxu0 %v385
  %v387 = vpop.f32.mrb[0].mxu0
  %v388 = vadd.f32 %v270, %v387
  %v389 = vpop.f32.mrb[0].mxu0
  %390 = vmatprep.mubr.f32.mxu0 0.0
  %v391 = vand.u32 %v171, 4294901760
  %392 = vmatmul.mubr.f32.gmra.mrb[0].mxu0 %v391
  %v393 = vpop.f32.mrb[0].mxu0
  %v394 = vadd.f32 %v280, %v393
  %v395 = vpop.f32.mrb[0].mxu0
  %396 = vdwg.mxu0
  %397 = vmatprep.subr.mxu0 0.0
  %v398 = vand.u32 %v149, 4294901760
  %v399 = vsub.f32 %v149, %v398
  %400 = vmatpush1.msra.mxu0 %v399
  %401 = vmatprep.subr.mxu0 0.0
  %v402 = vand.u32 %v150, 4294901760
  %v403 = vsub.f32 %v150, %v402
  %404 = vmatpush1.msra.mxu0 %v403
  %405 = vmatprep.subr.mxu0 0.0
  %v406 = vand.u32 %v151, 4294901760
  %v407 = vsub.f32 %v151, %v406
  %408 = vmatpush1.msra.mxu0 %v407
  %409 = vmatprep.subr.mxu0 0.0
  %v410 = vand.u32 %v152, 4294901760
  %v411 = vsub.f32 %v152, %v410
  %412 = vmatpush1.msra.mxu0 %v411
  %413 = vmatprep.subr.mxu0 0.0
  %v414 = vand.u32 %v153, 4294901760
  %v415 = vsub.f32 %v153, %v414
  %416 = vmatpush1.msra.mxu0 %v415
  %417 = vmatprep.subr.mxu0 0.0
  %418 = vmatpush1.msra.mxu0 0.0
  %419 = vmatprep.subr.mxu0 0.0
  %420 = vmatpush1.msra.mxu0 0.0
  %421 = vmatprep.subr.mxu0 0.0
  %422 = vmatpush1.msra.mxu0 0.0
  %423 = vmatprep.subr.mxu0 0.0
  %424 = vmatpush1.msra.mxu0 0.0
  %425 = vmatprep.subr.mxu0 0.0
  %426 = vmatpush1.msra.mxu0 0.0
  %427 = vmatprep.subr.mxu0 0.0
  %428 = vmatpush1.msra.mxu0 0.0
  %429 = vmatprep.subr.mxu0 0.0
  %430 = vmatpush1.msra.mxu0 0.0
  %431 = vmatprep.subr.mxu0 0.0
  %432 = vmatpush1.msra.mxu0 0.0
  %433 = vmatprep.subr.mxu0 0.0
  %434 = vmatpush1.msra.mxu0 0.0
  %435 = vmatprep.subr.mxu0 0.0
  %436 = vmatpush1.msra.mxu0 0.0
  %437 = vmatprep.subr.mxu0 0.0
  %438 = vmatpush1.msra.mxu0 0.0
  %439 = vmatprep.subr.mxu0 0.0
  %440 = vmatpush1.msra.mxu0 0.0
  %441 = vmatprep.subr.mxu0 0.0
  %442 = vmatpush1.msra.mxu0 0.0
  %443 = vmatprep.subr.mxu0 0.0
  %444 = vmatpush1.msra.mxu0 0.0
  %445 = vmatprep.subr.mxu0 0.0
  %446 = vmatpush1.msra.mxu0 0.0
  %447 = vmatprep.subr.mxu0 0.0
  %448 = vmatpush1.msra.mxu0 0.0
  %449 = vmatprep.subr.mxu0 0.0
  %450 = vmatpush1.msra.mxu0 0.0
  %451 = vmatprep.subr.mxu0 0.0
  %452 = vmatpush1.msra.mxu0 0.0
  %453 = vmatprep.subr.mxu0 0.0
  %454 = vmatpush1.msra.mxu0 0.0
  %455 = vmatprep.subr.mxu0 0.0
  %456 = vmatpush1.msra.mxu0 0.0
  %457 = vmatprep.subr.mxu0 0.0
  %458 = vmatpush1.msra.mxu0 0.0
  %459 = vmatprep.subr.mxu0 0.0
  %460 = vmatpush1.msra.mxu0 0.0
  %461 = vmatprep.subr.mxu0 0.0
  %462 = vmatpush1.msra.mxu0 0.0
  %463 = vmatprep.subr.mxu0 0.0
  %464 = vmatpush1.msra.mxu0 0.0
  %465 = vmatprep.subr.mxu0 0.0
  %466 = vmatpush1.msra.mxu0 0.0
  %467 = vmatprep.subr.mxu0 0.0
  %468 = vmatpush1.msra.mxu0 0.0
  %469 = vmatprep.subr.mxu0 0.0
  %470 = vmatpush1.msra.mxu0 0.0
  %471 = vmatprep.mubr.f32.mxu0 0.0
  %v472 = vand.u32 %v162, 4294901760
  %v473 = vsub.f32 %v162, %v472
  %474 = vmatmul.mubr.f32.gmra.mrb[0].mxu0 %v473
  %v475 = vpop.f32.mrb[0].mxu0
  %v476 = vadd.f32 %v376, %v475
  %v477 = vpop.f32.mrb[0].mxu0
  %478 = vmatprep.mubr.f32.mxu0 0.0
  %v479 = vand.u32 %v165, 4294901760
  %v480 = vsub.f32 %v165, %v479
  %481 = vmatmul.mubr.f32.gmra.mrb[0].mxu0 %v480
  %v482 = vpop.f32.mrb[0].mxu0
  %v483 = vadd.f32 %v382, %v482
  %v484 = vpop.f32.mrb[0].mxu0
  %485 = vmatprep.mubr.f32.mxu0 0.0
  %v486 = vand.u32 %v168, 4294901760
  %v487 = vsub.f32 %v168, %v486
  %488 = vmatmul.mubr.f32.gmra.mrb[0].mxu0 %v487
  %v489 = vpop.f32.mrb[0].mxu0
  %v490 = vadd.f32 %v388, %v489
  %v491 = vpop.f32.mrb[0].mxu0
  %492 = vmatprep.mubr.f32.mxu0 0.0
  %v493 = vand.u32 %v171, 4294901760
  %v494 = vsub.f32 %v171, %v493
  %495 = vmatmul.mubr.f32.gmra.mrb[0].mxu0 %v494
  %v496 = vpop.f32.mrb[0].mxu0
  %v497 = vadd.f32 %v394, %v496
  %v498 = vpop.f32.mrb[0].mxu0
  %499 = vdwg.mxu0
  %500 = vmatprep.subr.mxu0 0.0
  %v501 = vand.u32 %v149, 4294901760
  %502 = vmatpush1.msra.mxu0 %v501
  %503 = vmatprep.subr.mxu0 0.0
  %v504 = vand.u32 %v150, 4294901760
  %505 = vmatpush1.msra.mxu0 %v504
  %506 = vmatprep.subr.mxu0 0.0
  %v507 = vand.u32 %v151, 4294901760
  %508 = vmatpush1.msra.mxu0 %v507
  %509 = vmatprep.subr.mxu0 0.0
  %v510 = vand.u32 %v152, 4294901760
  %511 = vmatpush1.msra.mxu0 %v510
  %512 = vmatprep.subr.mxu0 0.0
  %v513 = vand.u32 %v153, 4294901760
  %514 = vmatpush1.msra.mxu0 %v513
  %515 = vmatprep.subr.mxu0 0.0
  %516 = vmatpush1.msra.mxu0 0.0
  %517 = vmatprep.subr.mxu0 0.0
  %518 = vmatpush1.msra.mxu0 0.0
  %519 = vmatprep.subr.mxu0 0.0
  %520 = vmatpush1.msra.mxu0 0.0
  %521 = vmatprep.subr.mxu0 0.0
  %522 = vmatpush1.msra.mxu0 0.0
  %523 = vmatprep.subr.mxu0 0.0
  %524 = vmatpush1.msra.mxu0 0.0
  %525 = vmatprep.subr.mxu0 0.0
  %526 = vmatpush1.msra.mxu0 0.0
  %527 = vmatprep.subr.mxu0 0.0
  %528 = vmatpush1.msra.mxu0 0.0
  %529 = vmatprep.subr.mxu0 0.0
  %530 = vmatpush1.msra.mxu0 0.0
  %531 = vmatprep.subr.mxu0 0.0
  %532 = vmatpush1.msra.mxu0 0.0
  %533 = vmatprep.subr.mxu0 0.0
  %534 = vmatpush1.msra.mxu0 0.0
  %535 = vmatprep.subr.mxu0 0.0
  %536 = vmatpush1.msra.mxu0 0.0
  %537 = vmatprep.subr.mxu0 0.0
  %538 = vmatpush1.msra.mxu0 0.0
  %539 = vmatprep.subr.mxu0 0.0
  %540 = vmatpush1.msra.mxu0 0.0
  %541 = vmatprep.subr.mxu0 0.0
  %542 = vmatpush1.msra.mxu0 0.0
  %543 = vmatprep.subr.mxu0 0.0
  %544 = vmatpush1.msra.mxu0 0.0
  %545 = vmatprep.subr.mxu0 0.0
  %546 = vmatpush1.msra.mxu0 0.0
  %547 = vmatprep.subr.mxu0 0.0
  %548 = vmatpush1.msra.mxu0 0.0
  %549 = vmatprep.subr.mxu0 0.0
  %550 = vmatpush1.msra.mxu0 0.0
  %551 = vmatprep.subr.mxu0 0.0
  %552 = vmatpush1.msra.mxu0 0.0
  %553 = vmatprep.subr.mxu0 0.0
  %554 = vmatpush1.msra.mxu0 0.0
  %555 = vmatprep.subr.mxu0 0.0
  %556 = vmatpush1.msra.mxu0 0.0
  %557 = vmatprep.subr.mxu0 0.0
  %558 = vmatpush1.msra.mxu0 0.0
  %559 = vmatprep.subr.mxu0 0.0
  %560 = vmatpush1.msra.mxu0 0.0
  %561 = vmatprep.subr.mxu0 0.0
  %562 = vmatpush1.msra.mxu0 0.0
  %563 = vmatprep.subr.mxu0 0.0
  %564 = vmatpush1.msra.mxu0 0.0
  %565 = vmatprep.subr.mxu0 0.0
  %566 = vmatpush1.msra.mxu0 0.0
  %567 = vmatprep.subr.mxu0 0.0
  %568 = vmatpush1.msra.mxu0 0.0
  %569 = vmatprep.mubr.f32.mxu0 0.0
  %v570 = vand.u32 %v162, 4294901760
  %v571 = vsub.f32 %v162, %v570
  %v572 = vand.u32 %v571, 4294901760
  %573 = vmatmul.mubr.f32.gmra.mrb[0].mxu0 %v572
  %v574 = vpop.f32.mrb[0].mxu0
  %v575 = vadd.f32 %v476, %v574
  %v576 = vpop.f32.mrb[0].mxu0
  %577 = vmatprep.mubr.f32.mxu0 0.0
  %v578 = vand.u32 %v165, 4294901760
  %v579 = vsub.f32 %v165, %v578
  %v580 = vand.u32 %v579, 4294901760
  %581 = vmatmul.mubr.f32.gmra.mrb[0].mxu0 %v580
  %v582 = vpop.f32.mrb[0].mxu0
  %v583 = vadd.f32 %v483, %v582
  %v584 = vpop.f32.mrb[0].mxu0
  %585 = vmatprep.mubr.f32.mxu0 0.0
  %v586 = vand.u32 %v168, 4294901760
  %v587 = vsub.f32 %v168, %v586
  %v588 = vand.u32 %v587, 4294901760
  %589 = vmatmul.mubr.f32.gmra.mrb[0].mxu0 %v588
  %v590 = vpop.f32.mrb[0].mxu0
  %v591 = vadd.f32 %v490, %v590
  %v592 = vpop.f32.mrb[0].mxu0
  %593 = vmatprep.mubr.f32.mxu0 0.0
  %v594 = vand.u32 %v171, 4294901760
  %v595 = vsub.f32 %v171, %v594
  %v596 = vand.u32 %v595, 4294901760
  %597 = vmatmul.mubr.f32.gmra.mrb[0].mxu0 %v596
  %v598 = vpop.f32.mrb[0].mxu0
  %v599 = vadd.f32 %v497, %v598
  %v600 = vpop.f32.mrb[0].mxu0
  %601 = vdwg.mxu0
  %602 = vmatprep.subr.mxu0 0.0
  %v603 = vand.u32 %v149, 4294901760
  %v604 = vsub.f32 %v149, %v603
  %v605 = vand.u32 %v604, 4294901760
  %606 = vmatpush1.msra.mxu0 %v605
  %607 = vmatprep.subr.mxu0 0.0
  %v608 = vand.u32 %v150, 4294901760
  %v609 = vsub.f32 %v150, %v608
  %v610 = vand.u32 %v609, 4294901760
  %611 = vmatpush1.msra.mxu0 %v610
  %612 = vmatprep.subr.mxu0 0.0
  %v613 = vand.u32 %v151, 4294901760
  %v614 = vsub.f32 %v151, %v613
  %v615 = vand.u32 %v614, 4294901760
  %616 = vmatpush1.msra.mxu0 %v615
  %617 = vmatprep.subr.mxu0 0.0
  %v618 = vand.u32 %v152, 4294901760
  %v619 = vsub.f32 %v152, %v618
  %v620 = vand.u32 %v619, 4294901760
  %621 = vmatpush1.msra.mxu0 %v620
  %622 = vmatprep.subr.mxu0 0.0
  %v623 = vand.u32 %v153, 4294901760
  %v624 = vsub.f32 %v153, %v623
  %v625 = vand.u32 %v624, 4294901760
  %626 = vmatpush1.msra.mxu0 %v625
  %627 = vmatprep.subr.mxu0 0.0
  %628 = vmatpush1.msra.mxu0 0.0
  %629 = vmatprep.subr.mxu0 0.0
  %630 = vmatpush1.msra.mxu0 0.0
  %631 = vmatprep.subr.mxu0 0.0
  %632 = vmatpush1.msra.mxu0 0.0
  %633 = vmatprep.subr.mxu0 0.0
  %634 = vmatpush1.msra.mxu0 0.0
  %635 = vmatprep.subr.mxu0 0.0
  %636 = vmatpush1.msra.mxu0 0.0
  %637 = vmatprep.subr.mxu0 0.0
  %638 = vmatpush1.msra.mxu0 0.0
  %639 = vmatprep.subr.mxu0 0.0
  %640 = vmatpush1.msra.mxu0 0.0
  %641 = vmatprep.subr.mxu0 0.0
  %642 = vmatpush1.msra.mxu0 0.0
  %643 = vmatprep.subr.mxu0 0.0
  %644 = vmatpush1.msra.mxu0 0.0
  %645 = vmatprep.subr.mxu0 0.0
  %646 = vmatpush1.msra.mxu0 0.0
  %647 = vmatprep.subr.mxu0 0.0
  %648 = vmatpush1.msra.mxu0 0.0
  %649 = vmatprep.subr.mxu0 0.0
  %650 = vmatpush1.msra.mxu0 0.0
  %651 = vmatprep.subr.mxu0 0.0
  %652 = vmatpush1.msra.mxu0 0.0
  %653 = vmatprep.subr.mxu0 0.0
  %654 = vmatpush1.msra.mxu0 0.0
  %655 = vmatprep.subr.mxu0 0.0
  %656 = vmatpush1.msra.mxu0 0.0
  %657 = vmatprep.subr.mxu0 0.0
  %658 = vmatpush1.msra.mxu0 0.0
  %659 = vmatprep.subr.mxu0 0.0
  %660 = vmatpush1.msra.mxu0 0.0
  %661 = vmatprep.subr.mxu0 0.0
  %662 = vmatpush1.msra.mxu0 0.0
  %663 = vmatprep.subr.mxu0 0.0
  %664 = vmatpush1.msra.mxu0 0.0
  %665 = vmatprep.subr.mxu0 0.0
  %666 = vmatpush1.msra.mxu0 0.0
  %667 = vmatprep.subr.mxu0 0.0
  %668 = vmatpush1.msra.mxu0 0.0
  %669 = vmatprep.subr.mxu0 0.0
  %670 = vmatpush1.msra.mxu0 0.0
  %671 = vmatprep.subr.mxu0 0.0
  %672 = vmatpush1.msra.mxu0 0.0
  %673 = vmatprep.subr.mxu0 0.0
  %674 = vmatpush1.msra.mxu0 0.0
  %675 = vmatprep.subr.mxu0 0.0
  %676 = vmatpush1.msra.mxu0 0.0
  %677 = vmatprep.subr.mxu0 0.0
  %678 = vmatpush1.msra.mxu0 0.0
  %679 = vmatprep.subr.mxu0 0.0
  %680 = vmatpush1.msra.mxu0 0.0
  %681 = vmatprep.mubr.f32.mxu0 0.0
  %v682 = vand.u32 %v162, 4294901760
  %683 = vmatmul.mubr.f32.gmra.mrb[0].mxu0 %v682
  %v684 = vpop.f32.mrb[0].mxu0
  %v685 = vadd.f32 %v575, %v684
  %v686 = vpop.f32.mrb[0].mxu0
  %687 = vmatprep.mubr.f32.mxu0 0.0
  %v688 = vand.u32 %v165, 4294901760
  %689 = vmatmul.mubr.f32.gmra.mrb[0].mxu0 %v688
  %v690 = vpop.f32.mrb[0].mxu0
  %v691 = vadd.f32 %v583, %v690
  %v692 = vpop.f32.mrb[0].mxu0
  %693 = vmatprep.mubr.f32.mxu0 0.0
  %v694 = vand.u32 %v168, 4294901760
  %695 = vmatmul.mubr.f32.gmra.mrb[0].mxu0 %v694
  %v696 = vpop.f32.mrb[0].mxu0
  %v697 = vadd.f32 %v591, %v696
  %v698 = vpop.f32.mrb[0].mxu0
  %699 = vmatprep.mubr.f32.mxu0 0.0
  %v700 = vand.u32 %v171, 4294901760
  %701 = vmatmul.mubr.f32.gmra.mrb[0].mxu0 %v700
  %v702 = vpop.f32.mrb[0].mxu0
  %v703 = vadd.f32 %v599, %v702
  %v704 = vpop.f32.mrb[0].mxu0
  %705 = vdwg.mxu0
  %706 = vmatprep.subr.mxu0 0.0
  %v707 = vand.u32 %v149, 4294901760
  %708 = vmatpush1.msra.mxu0 %v707
  %709 = vmatprep.subr.mxu0 0.0
  %v710 = vand.u32 %v150, 4294901760
  %711 = vmatpush1.msra.mxu0 %v710
  %712 = vmatprep.subr.mxu0 0.0
  %v713 = vand.u32 %v151, 4294901760
  %714 = vmatpush1.msra.mxu0 %v713
  %715 = vmatprep.subr.mxu0 0.0
  %v716 = vand.u32 %v152, 4294901760
  %717 = vmatpush1.msra.mxu0 %v716
  %718 = vmatprep.subr.mxu0 0.0
  %v719 = vand.u32 %v153, 4294901760
  %720 = vmatpush1.msra.mxu0 %v719
  %721 = vmatprep.subr.mxu0 0.0
  %722 = vmatpush1.msra.mxu0 0.0
  %723 = vmatprep.subr.mxu0 0.0
  %724 = vmatpush1.msra.mxu0 0.0
  %725 = vmatprep.subr.mxu0 0.0
  %726 = vmatpush1.msra.mxu0 0.0
  %727 = vmatprep.subr.mxu0 0.0
  %728 = vmatpush1.msra.mxu0 0.0
  %729 = vmatprep.subr.mxu0 0.0
  %730 = vmatpush1.msra.mxu0 0.0
  %731 = vmatprep.subr.mxu0 0.0
  %732 = vmatpush1.msra.mxu0 0.0
  %733 = vmatprep.subr.mxu0 0.0
  %734 = vmatpush1.msra.mxu0 0.0
  %735 = vmatprep.subr.mxu0 0.0
  %736 = vmatpush1.msra.mxu0 0.0
  %737 = vmatprep.subr.mxu0 0.0
  %738 = vmatpush1.msra.mxu0 0.0
  %739 = vmatprep.subr.mxu0 0.0
  %740 = vmatpush1.msra.mxu0 0.0
  %741 = vmatprep.subr.mxu0 0.0
  %742 = vmatpush1.msra.mxu0 0.0
  %743 = vmatprep.subr.mxu0 0.0
  %744 = vmatpush1.msra.mxu0 0.0
  %745 = vmatprep.subr.mxu0 0.0
  %746 = vmatpush1.msra.mxu0 0.0
  %747 = vmatprep.subr.mxu0 0.0
  %748 = vmatpush1.msra.mxu0 0.0
  %749 = vmatprep.subr.mxu0 0.0
  %750 = vmatpush1.msra.mxu0 0.0
  %751 = vmatprep.subr.mxu0 0.0
  %752 = vmatpush1.msra.mxu0 0.0
  %753 = vmatprep.subr.mxu0 0.0
  %754 = vmatpush1.msra.mxu0 0.0
  %755 = vmatprep.subr.mxu0 0.0
  %756 = vmatpush1.msra.mxu0 0.0
  %757 = vmatprep.subr.mxu0 0.0
  %758 = vmatpush1.msra.mxu0 0.0
  %759 = vmatprep.subr.mxu0 0.0
  %760 = vmatpush1.msra.mxu0 0.0
  %761 = vmatprep.subr.mxu0 0.0
  %762 = vmatpush1.msra.mxu0 0.0
  %763 = vmatprep.subr.mxu0 0.0
  %764 = vmatpush1.msra.mxu0 0.0
  %765 = vmatprep.subr.mxu0 0.0
  %766 = vmatpush1.msra.mxu0 0.0
  %767 = vmatprep.subr.mxu0 0.0
  %768 = vmatpush1.msra.mxu0 0.0
  %769 = vmatprep.subr.mxu0 0.0
  %770 = vmatpush1.msra.mxu0 0.0
  %771 = vmatprep.subr.mxu0 0.0
  %772 = vmatpush1.msra.mxu0 0.0
  %773 = vmatprep.subr.mxu0 0.0
  %774 = vmatpush1.msra.mxu0 0.0
  %775 = vmatprep.mubr.f32.mxu0 0.0
  %v776 = vand.u32 %v162, 4294901760
  %777 = vmatmul.mubr.f32.gmra.mrb[0].mxu0 %v776
  %v778 = vpop.f32.mrb[0].mxu0
  %v779 = vadd.f32 %v685, %v778
  %v780 = vpop.f32.mrb[0].mxu0
  %781 = vmatprep.mubr.f32.mxu0 0.0
  %v782 = vand.u32 %v165, 4294901760
  %783 = vmatmul.mubr.f32.gmra.mrb[0].mxu0 %v782
  %v784 = vpop.f32.mrb[0].mxu0
  %v785 = vadd.f32 %v691, %v784
  %v786 = vpop.f32.mrb[0].mxu0
  %787 = vmatprep.mubr.f32.mxu0 0.0
  %v788 = vand.u32 %v168, 4294901760
  %789 = vmatmul.mubr.f32.gmra.mrb[0].mxu0 %v788
  %v790 = vpop.f32.mrb[0].mxu0
  %v791 = vadd.f32 %v697, %v790
  %v792 = vpop.f32.mrb[0].mxu0
  %793 = vmatprep.mubr.f32.mxu0 0.0
  %v794 = vand.u32 %v171, 4294901760
  %795 = vmatmul.mubr.f32.gmra.mrb[0].mxu0 %v794
  %v796 = vpop.f32.mrb[0].mxu0
  %v797 = vadd.f32 %v703, %v796
  %v798 = vpop.f32.mrb[0].mxu0
  %799 = vdwg.mxu0
  %v800 = vmax.f32 %v779, 0.0
  %v801 = vmax.f32 %v785, 0.0
  %v802 = vmax.f32 %v791, 0.0
  %v803 = vmax.f32 %v797, 0.0
  %808 = vrot.lane.b32.xlu0 %v800, 124
  %v809 = vpop.permute.xlu0 %808
  %810 = vrot.lane.b32.xlu0 %v801, 124
  %v811 = vpop.permute.xlu0 %810
  %812 = vrot.lane.b32.xlu0 %v802, 124
  %v813 = vpop.permute.xlu0 %812
  %814 = vrot.lane.b32.xlu0 %v803, 124
  %v815 = vpop.permute.xlu0 %814
  %v820 = vadd.f32 %v800, %v809
  %v821 = vadd.f32 %v801, %v811
  %v822 = vadd.f32 %v802, %v813
  %v823 = vadd.f32 %v803, %v815
  %v824 = vmul.f32 %v820, 0.5
  %v825 = vmul.f32 %v821, 0.5
  %v826 = vmul.f32 %v822, 0.5
  %v827 = vmul.f32 %v823, 0.5
  %vm828 = vcmask 31744
  %829 = vst.msk [vmem:[#allocation3] sm:$0xff] %vm828, %v824
  %830 = vst.msk [vmem:[#allocation3 + $0x8] sm:$0xff] %vm828, %v825
  %831 = vst.msk [vmem:[#allocation3 + $0x10] sm:$0xff] %vm828, %v826
  %832 = vst.msk [vmem:[#allocation3 + $0x18] sm:$0xff] %vm828, %v827
  %v833 = vld [vmem:[#allocation3] ss:$2 sm:$0xff]
  %s834 = scalar_lea.vmem [#allocation3], 16
  %v835 = vld [vmem:[%s834] ss:$2 sm:$0xff]
  %s836 = scalar_lea.vmem [#allocation3], 1
  %v837 = vld [vmem:[%s836] ss:$2 sm:$0xff]
  %s838 = scalar_lea.vmem [#allocation3], 17
  %v839 = vld [vmem:[%s838] ss:$2 sm:$0xff]
  %v840 = vmax.f32 %v833, %v837
  %v841 = vmax.f32 %v835, %v839
  %844 = vrot.lane.b32.xlu0 %v840, 126
  %v845 = vpop.permute.xlu0 %844
  %846 = vrot.lane.b32.xlu0 %v841, 126
  %v847 = vpop.permute.xlu0 %846
  %v850 = vmax.f32 %v840, %v845
  %v851 = vmax.f32 %v841, %v847
  %vm852 = vcmask 80896
  %853 = vst.msk [vmem:[#allocation4] sm:$0xff] %vm852, 0.0
  %854 = vst.msk [vmem:[#allocation4 + $0x8] sm:$0xff] %vm852, 0.0
  %vm855 = vcmask 13312
  %856 = vst.msk [vmem:[#allocation4 + $0x2] sm:$0x3f] %vm855, %v850
  %858 = vrot.lane.b32.xlu0 %v850, 2
  %v859 = vpop.permute.xlu0 %858
  %vm861 = vcmask 30736
  %862 = vst.msk [vmem:[#allocation4 + $0x1] sm:$0x7f] %vm861, %v859
  %863 = vrot.lane.b32.xlu0 %v850, 4
  %v864 = vpop.permute.xlu0 %863
  %vm866 = vcmask 48160
  %867 = vst.msk [vmem:[#allocation4] sm:$0xff] %vm866, %v864
  %868 = vrot.lane.b32.xlu0 %v850, 6
  %v869 = vpop.permute.xlu0 %868
  %vm871 = vcmask 64561
  %872 = vst.msk [vmem:[#allocation4 - $0x1] sm:$0xfe] %vm871, %v869
  %873 = vrot.lane.b32.xlu0 %v850, 8
  %v874 = vpop.permute.xlu0 %873
  %vm876 = vcmask 80962
  %877 = vst.msk [vmem:[#allocation4 - $0x2] sm:$0xfc] %vm876, %v874
  %878 = vst.msk [vmem:[#allocation4 + $0xa] sm:$0x3f] %vm855, %v851
  %880 = vrot.lane.b32.xlu0 %v851, 2
  %v881 = vpop.permute.xlu0 %880
  %883 = vst.msk [vmem:[#allocation4 + $0x9] sm:$0x7f] %vm861, %v881
  %884 = vrot.lane.b32.xlu0 %v851, 4
  %v885 = vpop.permute.xlu0 %884
  %887 = vst.msk [vmem:[#allocation4 + $0x8] sm:$0xff] %vm866, %v885
  %888 = vrot.lane.b32.xlu0 %v851, 6
  %v889 = vpop.permute.xlu0 %888
  %891 = vst.msk [vmem:[#allocation4 + $0x7] sm:$0xfe] %vm871, %v889
  %892 = vrot.lane.b32.xlu0 %v851, 8
  %v893 = vpop.permute.xlu0 %892
  %895 = vst.msk [vmem:[#allocation4 + $0x6] sm:$0xfc] %vm876, %v893
  %v896 = vld [vmem:[#allocation4] sm:$0xff]
  %v897 = vld [vmem:[#allocation4 + $0x8] sm:$0xff]
  %v898 = vld [vmem:[%s3] sm:$0xff]
  %v899 = vld [vmem:[%s3 + $0x8] sm:$0x3]
  %v900 = vld [vmem:[%s4] sm:$0x1]
  %v902 = vlaneseq
  %v903 = vshrl.u32 %v902, 7
  %v904 = vsub.s32 0, %v903
  %v905 = vrot.slane %v900, %v904
  %v908 = vsel %vm852, %v896, 0
  %v911 = vsel %vm852, %v897, 0
  %vm913 = vcmask 1041408
  %v915 = vsel %vm913, %v899, 0
  %917 = vmatprep.subr.mxu0 0.0
  %v918 = vand.u32 %v898, 4294901760
  %919 = vmatpush1.msra.mxu0 %v918
  %920 = vmatprep.subr.mxu0 0.0
  %v921 = vand.u32 %v915, 4294901760
  %922 = vmatpush1.msra.mxu0 %v921
  %923 = vmatprep.subr.mxu0 0.0
  %924 = vmatpush1.msra.mxu0 0.0
  %925 = vmatprep.subr.mxu0 0.0
  %926 = vmatpush1.msra.mxu0 0.0
  %927 = vmatprep.subr.mxu0 0.0
  %928 = vmatpush1.msra.mxu0 0.0
  %929 = vmatprep.subr.mxu0 0.0
  %930 = vmatpush1.msra.mxu0 0.0
  %931 = vmatprep.subr.mxu0 0.0
  %932 = vmatpush1.msra.mxu0 0.0
  %933 = vmatprep.subr.mxu0 0.0
  %934 = vmatpush1.msra.mxu0 0.0
  %935 = vmatprep.subr.mxu0 0.0
  %936 = vmatpush1.msra.mxu0 0.0
  %937 = vmatprep.subr.mxu0 0.0
  %938 = vmatpush1.msra.mxu0 0.0
  %939 = vmatprep.subr.mxu0 0.0
  %940 = vmatpush1.msra.mxu0 0.0
  %941 = vmatprep.subr.mxu0 0.0
  %942 = vmatpush1.msra.mxu0 0.0
  %943 = vmatprep.subr.mxu0 0.0
  %944 = vmatpush1.msra.mxu0 0.0
  %945 = vmatprep.subr.mxu0 0.0
  %946 = vmatpush1.msra.mxu0 0.0
  %947 = vmatprep.subr.mxu0 0.0
  %948 = vmatpush1.msra.mxu0 0.0
  %949 = vmatprep.subr.mxu0 0.0
  %950 = vmatpush1.msra.mxu0 0.0
  %951 = vmatprep.subr.mxu0 0.0
  %952 = vmatpush1.msra.mxu0 0.0
  %953 = vmatprep.subr.mxu0 0.0
  %954 = vmatpush1.msra.mxu0 0.0
  %955 = vmatprep.subr.mxu0 0.0
  %956 = vmatpush1.msra.mxu0 0.0
  %957 = vmatprep.subr.mxu0 0.0
  %958 = vmatpush1.msra.mxu0 0.0
  %959 = vmatprep.subr.mxu0 0.0
  %960 = vmatpush1.msra.mxu0 0.0
  %961 = vmatprep.subr.mxu0 0.0
  %962 = vmatpush1.msra.mxu0 0.0
  %963 = vmatprep.subr.mxu0 0.0
  %964 = vmatpush1.msra.mxu0 0.0
  %965 = vmatprep.subr.mxu0 0.0
  %966 = vmatpush1.msra.mxu0 0.0
  %967 = vmatprep.subr.mxu0 0.0
  %968 = vmatpush1.msra.mxu0 0.0
  %969 = vmatprep.subr.mxu0 0.0
  %970 = vmatpush1.msra.mxu0 0.0
  %971 = vmatprep.subr.mxu0 0.0
  %972 = vmatpush1.msra.mxu0 0.0
  %973 = vmatprep.subr.mxu0 0.0
  %974 = vmatpush1.msra.mxu0 0.0
  %975 = vmatprep.subr.mxu0 0.0
  %976 = vmatpush1.msra.mxu0 0.0
  %977 = vmatprep.subr.mxu0 0.0
  %978 = vmatpush1.msra.mxu0 0.0
  %979 = vmatprep.subr.mxu0 0.0
  %980 = vmatpush1.msra.mxu0 0.0
  %981 = vmatprep.subr.mxu0 0.0
  %982 = vmatpush1.msra.mxu0 0.0
  %983 = vmatprep.mubr.f32.mxu0 0.0
  %v984 = vand.u32 %v908, 4294901760
  %v985 = vsub.f32 %v908, %v984
  %v986 = vand.u32 %v985, 4294901760
  %v987 = vsub.f32 %v985, %v986
  %v988 = vand.u32 %v987, 4294901760
  %989 = vmatmul.mubr.f32.gmra.mrb[0].mxu0 %v988
  %v990 = vpop.f32.mrb[0].mxu0
  %v991 = vadd.f32 %v905, %v990
  %v992 = vpop.f32.mrb[0].mxu0
  %993 = vmatprep.mubr.f32.mxu0 0.0
  %v994 = vand.u32 %v911, 4294901760
  %v995 = vsub.f32 %v911, %v994
  %v996 = vand.u32 %v995, 4294901760
  %v997 = vsub.f32 %v995, %v996
  %v998 = vand.u32 %v997, 4294901760
  %999 = vmatmul.mubr.f32.gmra.mrb[0].mxu0 %v998
  %v1000 = vpop.f32.mrb[0].mxu0
  %v1001 = vadd.f32 %v905, %v1000
  %v1002 = vpop.f32.mrb[0].mxu0
  %1003 = vdwg.mxu0
  %1004 = vmatprep.subr.mxu0 0.0
  %v1005 = vand.u32 %v898, 4294901760
  %v1006 = vsub.f32 %v898, %v1005
  %v1007 = vand.u32 %v1006, 4294901760
  %v1008 = vsub.f32 %v1006, %v1007
  %v1009 = vand.u32 %v1008, 4294901760
  %1010 = vmatpush1.msra.mxu0 %v1009
  %1011 = vmatprep.subr.mxu0 0.0
  %v1012 = vand.u32 %v915, 4294901760
  %v1013 = vsub.f32 %v915, %v1012
  %v1014 = vand.u32 %v1013, 4294901760
  %v1015 = vsub.f32 %v1013, %v1014
  %v1016 = vand.u32 %v1015, 4294901760
  %1017 = vmatpush1.msra.mxu0 %v1016
  %1018 = vmatprep.subr.mxu0 0.0
  %1019 = vmatpush1.msra.mxu0 0.0
  %1020 = vmatprep.subr.mxu0 0.0
  %1021 = vmatpush1.msra.mxu0 0.0
  %1022 = vmatprep.subr.mxu0 0.0
  %1023 = vmatpush1.msra.mxu0 0.0
  %1024 = vmatprep.subr.mxu0 0.0
  %1025 = vmatpush1.msra.mxu0 0.0
  %1026 = vmatprep.subr.mxu0 0.0
  %1027 = vmatpush1.msra.mxu0 0.0
  %1028 = vmatprep.subr.mxu0 0.0
  %1029 = vmatpush1.msra.mxu0 0.0
  %1030 = vmatprep.subr.mxu0 0.0
  %1031 = vmatpush1.msra.mxu0 0.0
  %1032 = vmatprep.subr.mxu0 0.0
  %1033 = vmatpush1.msra.mxu0 0.0
  %1034 = vmatprep.subr.mxu0 0.0
  %1035 = vmatpush1.msra.mxu0 0.0
  %1036 = vmatprep.subr.mxu0 0.0
  %1037 = vmatpush1.msra.mxu0 0.0
  %1038 = vmatprep.subr.mxu0 0.0
  %1039 = vmatpush1.msra.mxu0 0.0
  %1040 = vmatprep.subr.mxu0 0.0
  %1041 = vmatpush1.msra.mxu0 0.0
  %1042 = vmatprep.subr.mxu0 0.0
  %1043 = vmatpush1.msra.mxu0 0.0
  %1044 = vmatprep.subr.mxu0 0.0
  %1045 = vmatpush1.msra.mxu0 0.0
  %1046 = vmatprep.subr.mxu0 0.0
  %1047 = vmatpush1.msra.mxu0 0.0
  %1048 = vmatprep.subr.mxu0 0.0
  %1049 = vmatpush1.msra.mxu0 0.0
  %1050 = vmatprep.subr.mxu0 0.0
  %1051 = vmatpush1.msra.mxu0 0.0
  %1052 = vmatprep.subr.mxu0 0.0
  %1053 = vmatpush1.msra.mxu0 0.0
  %1054 = vmatprep.subr.mxu0 0.0
  %1055 = vmatpush1.msra.mxu0 0.0
  %1056 = vmatprep.subr.mxu0 0.0
  %1057 = vmatpush1.msra.mxu0 0.0
  %1058 = vmatprep.subr.mxu0 0.0
  %1059 = vmatpush1.msra.mxu0 0.0
  %1060 = vmatprep.subr.mxu0 0.0
  %1061 = vmatpush1.msra.mxu0 0.0
  %1062 = vmatprep.subr.mxu0 0.0
  %1063 = vmatpush1.msra.mxu0 0.0
  %1064 = vmatprep.subr.mxu0 0.0
  %1065 = vmatpush1.msra.mxu0 0.0
  %1066 = vmatprep.subr.mxu0 0.0
  %1067 = vmatpush1.msra.mxu0 0.0
  %1068 = vmatprep.subr.mxu0 0.0
  %1069 = vmatpush1.msra.mxu0 0.0
  %1070 = vmatprep.subr.mxu0 0.0
  %1071 = vmatpush1.msra.mxu0 0.0
  %1072 = vmatprep.subr.mxu0 0.0
  %1073 = vmatpush1.msra.mxu0 0.0
  %1074 = vmatprep.subr.mxu0 0.0
  %1075 = vmatpush1.msra.mxu0 0.0
  %1076 = vmatprep.subr.mxu0 0.0
  %1077 = vmatpush1.msra.mxu0 0.0
  %1078 = vmatprep.mubr.f32.mxu0 0.0
  %v1079 = vand.u32 %v908, 4294901760
  %1080 = vmatmul.mubr.f32.gmra.mrb[0].mxu0 %v1079
  %v1081 = vpop.f32.mrb[0].mxu0
  %v1082 = vadd.f32 %v991, %v1081
  %v1083 = vpop.f32.mrb[0].mxu0
  %1084 = vmatprep.mubr.f32.mxu0 0.0
  %v1085 = vand.u32 %v911, 4294901760
  %1086 = vmatmul.mubr.f32.gmra.mrb[0].mxu0 %v1085
  %v1087 = vpop.f32.mrb[0].mxu0
  %v1088 = vadd.f32 %v1001, %v1087
  %v1089 = vpop.f32.mrb[0].mxu0
  %1090 = vdwg.mxu0
  %1091 = vmatprep.subr.mxu0 0.0
  %v1092 = vand.u32 %v898, 4294901760
  %v1093 = vsub.f32 %v898, %v1092
  %1094 = vmatpush1.msra.mxu0 %v1093
  %1095 = vmatprep.subr.mxu0 0.0
  %v1096 = vand.u32 %v915, 4294901760
  %v1097 = vsub.f32 %v915, %v1096
  %1098 = vmatpush1.msra.mxu0 %v1097
  %1099 = vmatprep.subr.mxu0 0.0
  %1100 = vmatpush1.msra.mxu0 0.0
  %1101 = vmatprep.subr.mxu0 0.0
  %1102 = vmatpush1.msra.mxu0 0.0
  %1103 = vmatprep.subr.mxu0 0.0
  %1104 = vmatpush1.msra.mxu0 0.0
  %1105 = vmatprep.subr.mxu0 0.0
  %1106 = vmatpush1.msra.mxu0 0.0
  %1107 = vmatprep.subr.mxu0 0.0
  %1108 = vmatpush1.msra.mxu0 0.0
  %1109 = vmatprep.subr.mxu0 0.0
  %1110 = vmatpush1.msra.mxu0 0.0
  %1111 = vmatprep.subr.mxu0 0.0
  %1112 = vmatpush1.msra.mxu0 0.0
  %1113 = vmatprep.subr.mxu0 0.0
  %1114 = vmatpush1.msra.mxu0 0.0
  %1115 = vmatprep.subr.mxu0 0.0
  %1116 = vmatpush1.msra.mxu0 0.0
  %1117 = vmatprep.subr.mxu0 0.0
  %1118 = vmatpush1.msra.mxu0 0.0
  %1119 = vmatprep.subr.mxu0 0.0
  %1120 = vmatpush1.msra.mxu0 0.0
  %1121 = vmatprep.subr.mxu0 0.0
  %1122 = vmatpush1.msra.mxu0 0.0
  %1123 = vmatprep.subr.mxu0 0.0
  %1124 = vmatpush1.msra.mxu0 0.0
  %1125 = vmatprep.subr.mxu0 0.0
  %1126 = vmatpush1.msra.mxu0 0.0
  %1127 = vmatprep.subr.mxu0 0.0
  %1128 = vmatpush1.msra.mxu0 0.0
  %1129 = vmatprep.subr.mxu0 0.0
  %1130 = vmatpush1.msra.mxu0 0.0
  %1131 = vmatprep.subr.mxu0 0.0
  %1132 = vmatpush1.msra.mxu0 0.0
  %1133 = vmatprep.subr.mxu0 0.0
  %1134 = vmatpush1.msra.mxu0 0.0
  %1135 = vmatprep.subr.mxu0 0.0
  %1136 = vmatpush1.msra.mxu0 0.0
  %1137 = vmatprep.subr.mxu0 0.0
  %1138 = vmatpush1.msra.mxu0 0.0
  %1139 = vmatprep.subr.mxu0 0.0
  %1140 = vmatpush1.msra.mxu0 0.0
  %1141 = vmatprep.subr.mxu0 0.0
  %1142 = vmatpush1.msra.mxu0 0.0
  %1143 = vmatprep.subr.mxu0 0.0
  %1144 = vmatpush1.msra.mxu0 0.0
  %1145 = vmatprep.subr.mxu0 0.0
  %1146 = vmatpush1.msra.mxu0 0.0
  %1147 = vmatprep.subr.mxu0 0.0
  %1148 = vmatpush1.msra.mxu0 0.0
  %1149 = vmatprep.subr.mxu0 0.0
  %1150 = vmatpush1.msra.mxu0 0.0
  %1151 = vmatprep.subr.mxu0 0.0
  %1152 = vmatpush1.msra.mxu0 0.0
  %1153 = vmatprep.subr.mxu0 0.0
  %1154 = vmatpush1.msra.mxu0 0.0
  %1155 = vmatprep.subr.mxu0 0.0
  %1156 = vmatpush1.msra.mxu0 0.0
  %1157 = vmatprep.subr.mxu0 0.0
  %1158 = vmatpush1.msra.mxu0 0.0
  %1159 = vmatprep.mubr.f32.mxu0 0.0
  %v1160 = vand.u32 %v908, 4294901760
  %v1161 = vsub.f32 %v908, %v1160
  %1162 = vmatmul.mubr.f32.gmra.mrb[0].mxu0 %v1161
  %v1163 = vpop.f32.mrb[0].mxu0
  %v1164 = vadd.f32 %v1082, %v1163
  %v1165 = vpop.f32.mrb[0].mxu0
  %1166 = vmatprep.mubr.f32.mxu0 0.0
  %v1167 = vand.u32 %v911, 4294901760
  %v1168 = vsub.f32 %v911, %v1167
  %1169 = vmatmul.mubr.f32.gmra.mrb[0].mxu0 %v1168
  %v1170 = vpop.f32.mrb[0].mxu0
  %v1171 = vadd.f32 %v1088, %v1170
  %v1172 = vpop.f32.mrb[0].mxu0
  %1173 = vdwg.mxu0
  %1174 = vmatprep.subr.mxu0 0.0
  %v1175 = vand.u32 %v898, 4294901760
  %1176 = vmatpush1.msra.mxu0 %v1175
  %1177 = vmatprep.subr.mxu0 0.0
  %v1178 = vand.u32 %v915, 4294901760
  %1179 = vmatpush1.msra.mxu0 %v1178
  %1180 = vmatprep.subr.mxu0 0.0
  %1181 = vmatpush1.msra.mxu0 0.0
  %1182 = vmatprep.subr.mxu0 0.0
  %1183 = vmatpush1.msra.mxu0 0.0
  %1184 = vmatprep.subr.mxu0 0.0
  %1185 = vmatpush1.msra.mxu0 0.0
  %1186 = vmatprep.subr.mxu0 0.0
  %1187 = vmatpush1.msra.mxu0 0.0
  %1188 = vmatprep.subr.mxu0 0.0
  %1189 = vmatpush1.msra.mxu0 0.0
  %1190 = vmatprep.subr.mxu0 0.0
  %1191 = vmatpush1.msra.mxu0 0.0
  %1192 = vmatprep.subr.mxu0 0.0
  %1193 = vmatpush1.msra.mxu0 0.0
  %1194 = vmatprep.subr.mxu0 0.0
  %1195 = vmatpush1.msra.mxu0 0.0
  %1196 = vmatprep.subr.mxu0 0.0
  %1197 = vmatpush1.msra.mxu0 0.0
  %1198 = vmatprep.subr.mxu0 0.0
  %1199 = vmatpush1.msra.mxu0 0.0
  %1200 = vmatprep.subr.mxu0 0.0
  %1201 = vmatpush1.msra.mxu0 0.0
  %1202 = vmatprep.subr.mxu0 0.0
  %1203 = vmatpush1.msra.mxu0 0.0
  %1204 = vmatprep.subr.mxu0 0.0
  %1205 = vmatpush1.msra.mxu0 0.0
  %1206 = vmatprep.subr.mxu0 0.0
  %1207 = vmatpush1.msra.mxu0 0.0
  %1208 = vmatprep.subr.mxu0 0.0
  %1209 = vmatpush1.msra.mxu0 0.0
  %1210 = vmatprep.subr.mxu0 0.0
  %1211 = vmatpush1.msra.mxu0 0.0
  %1212 = vmatprep.subr.mxu0 0.0
  %1213 = vmatpush1.msra.mxu0 0.0
  %1214 = vmatprep.subr.mxu0 0.0
  %1215 = vmatpush1.msra.mxu0 0.0
  %1216 = vmatprep.subr.mxu0 0.0
  %1217 = vmatpush1.msra.mxu0 0.0
  %1218 = vmatprep.subr.mxu0 0.0
  %1219 = vmatpush1.msra.mxu0 0.0
  %1220 = vmatprep.subr.mxu0 0.0
  %1221 = vmatpush1.msra.mxu0 0.0
  %1222 = vmatprep.subr.mxu0 0.0
  %1223 = vmatpush1.msra.mxu0 0.0
  %1224 = vmatprep.subr.mxu0 0.0
  %1225 = vmatpush1.msra.mxu0 0.0
  %1226 = vmatprep.subr.mxu0 0.0
  %1227 = vmatpush1.msra.mxu0 0.0
  %1228 = vmatprep.subr.mxu0 0.0
  %1229 = vmatpush1.msra.mxu0 0.0
  %1230 = vmatprep.subr.mxu0 0.0
  %1231 = vmatpush1.msra.mxu0 0.0
  %1232 = vmatprep.subr.mxu0 0.0
  %1233 = vmatpush1.msra.mxu0 0.0
  %1234 = vmatprep.subr.mxu0 0.0
  %1235 = vmatpush1.msra.mxu0 0.0
  %1236 = vmatprep.subr.mxu0 0.0
  %1237 = vmatpush1.msra.mxu0 0.0
  %1238 = vmatprep.subr.mxu0 0.0
  %1239 = vmatpush1.msra.mxu0 0.0
  %1240 = vmatprep.mubr.f32.mxu0 0.0
  %v1241 = vand.u32 %v908, 4294901760
  %v1242 = vsub.f32 %v908, %v1241
  %v1243 = vand.u32 %v1242, 4294901760
  %1244 = vmatmul.mubr.f32.gmra.mrb[0].mxu0 %v1243
  %v1245 = vpop.f32.mrb[0].mxu0
  %v1246 = vadd.f32 %v1164, %v1245
  %v1247 = vpop.f32.mrb[0].mxu0
  %1248 = vmatprep.mubr.f32.mxu0 0.0
  %v1249 = vand.u32 %v911, 4294901760
  %v1250 = vsub.f32 %v911, %v1249
  %v1251 = vand.u32 %v1250, 4294901760
  %1252 = vmatmul.mubr.f32.gmra.mrb[0].mxu0 %v1251
  %v1253 = vpop.f32.mrb[0].mxu0
  %v1254 = vadd.f32 %v1171, %v1253
  %v1255 = vpop.f32.mrb[0].mxu0
  %1256 = vdwg.mxu0
  %1257 = vmatprep.subr.mxu0 0.0
  %v1258 = vand.u32 %v898, 4294901760
  %v1259 = vsub.f32 %v898, %v1258
  %v1260 = vand.u32 %v1259, 4294901760
  %1261 = vmatpush1.msra.mxu0 %v1260
  %1262 = vmatprep.subr.mxu0 0.0
  %v1263 = vand.u32 %v915, 4294901760
  %v1264 = vsub.f32 %v915, %v1263
  %v1265 = vand.u32 %v1264, 4294901760
  %1266 = vmatpush1.msra.mxu0 %v1265
  %1267 = vmatprep.subr.mxu0 0.0
  %1268 = vmatpush1.msra.mxu0 0.0
  %1269 = vmatprep.subr.mxu0 0.0
  %1270 = vmatpush1.msra.mxu0 0.0
  %1271 = vmatprep.subr.mxu0 0.0
  %1272 = vmatpush1.msra.mxu0 0.0
  %1273 = vmatprep.subr.mxu0 0.0
  %1274 = vmatpush1.msra.mxu0 0.0
  %1275 = vmatprep.subr.mxu0 0.0
  %1276 = vmatpush1.msra.mxu0 0.0
  %1277 = vmatprep.subr.mxu0 0.0
  %1278 = vmatpush1.msra.mxu0 0.0
  %1279 = vmatprep.subr.mxu0 0.0
  %1280 = vmatpush1.msra.mxu0 0.0
  %1281 = vmatprep.subr.mxu0 0.0
  %1282 = vmatpush1.msra.mxu0 0.0
  %1283 = vmatprep.subr.mxu0 0.0
  %1284 = vmatpush1.msra.mxu0 0.0
  %1285 = vmatprep.subr.mxu0 0.0
  %1286 = vmatpush1.msra.mxu0 0.0
  %1287 = vmatprep.subr.mxu0 0.0
  %1288 = vmatpush1.msra.mxu0 0.0
  %1289 = vmatprep.subr.mxu0 0.0
  %1290 = vmatpush1.msra.mxu0 0.0
  %1291 = vmatprep.subr.mxu0 0.0
  %1292 = vmatpush1.msra.mxu0 0.0
  %1293 = vmatprep.subr.mxu0 0.0
  %1294 = vmatpush1.msra.mxu0 0.0
  %1295 = vmatprep.subr.mxu0 0.0
  %1296 = vmatpush1.msra.mxu0 0.0
  %1297 = vmatprep.subr.mxu0 0.0
  %1298 = vmatpush1.msra.mxu0 0.0
  %1299 = vmatprep.subr.mxu0 0.0
  %1300 = vmatpush1.msra.mxu0 0.0
  %1301 = vmatprep.subr.mxu0 0.0
  %1302 = vmatpush1.msra.mxu0 0.0
  %1303 = vmatprep.subr.mxu0 0.0
  %1304 = vmatpush1.msra.mxu0 0.0
  %1305 = vmatprep.subr.mxu0 0.0
  %1306 = vmatpush1.msra.mxu0 0.0
  %1307 = vmatprep.subr.mxu0 0.0
  %1308 = vmatpush1.msra.mxu0 0.0
  %1309 = vmatprep.subr.mxu0 0.0
  %1310 = vmatpush1.msra.mxu0 0.0
  %1311 = vmatprep.subr.mxu0 0.0
  %1312 = vmatpush1.msra.mxu0 0.0
  %1313 = vmatprep.subr.mxu0 0.0
  %1314 = vmatpush1.msra.mxu0 0.0
  %1315 = vmatprep.subr.mxu0 0.0
  %1316 = vmatpush1.msra.mxu0 0.0
  %1317 = vmatprep.subr.mxu0 0.0
  %1318 = vmatpush1.msra.mxu0 0.0
  %1319 = vmatprep.subr.mxu0 0.0
  %1320 = vmatpush1.msra.mxu0 0.0
  %1321 = vmatprep.subr.mxu0 0.0
  %1322 = vmatpush1.msra.mxu0 0.0
  %1323 = vmatprep.subr.mxu0 0.0
  %1324 = vmatpush1.msra.mxu0 0.0
  %1325 = vmatprep.subr.mxu0 0.0
  %1326 = vmatpush1.msra.mxu0 0.0
  %1327 = vmatprep.mubr.f32.mxu0 0.0
  %v1328 = vand.u32 %v908, 4294901760
  %1329 = vmatmul.mubr.f32.gmra.mrb[0].mxu0 %v1328
  %v1330 = vpop.f32.mrb[0].mxu0
  %v1331 = vadd.f32 %v1246, %v1330
  %v1332 = vpop.f32.mrb[0].mxu0
  %1333 = vmatprep.mubr.f32.mxu0 0.0
  %v1334 = vand.u32 %v911, 4294901760
  %1335 = vmatmul.mubr.f32.gmra.mrb[0].mxu0 %v1334
  %v1336 = vpop.f32.mrb[0].mxu0
  %v1337 = vadd.f32 %v1254, %v1336
  %v1338 = vpop.f32.mrb[0].mxu0
  %1339 = vdwg.mxu0
  %1340 = vmatprep.subr.mxu0 0.0
  %v1341 = vand.u32 %v898, 4294901760
  %1342 = vmatpush1.msra.mxu0 %v1341
  %1343 = vmatprep.subr.mxu0 0.0
  %v1344 = vand.u32 %v915, 4294901760
  %1345 = vmatpush1.msra.mxu0 %v1344
  %1346 = vmatprep.subr.mxu0 0.0
  %1347 = vmatpush1.msra.mxu0 0.0
  %1348 = vmatprep.subr.mxu0 0.0
  %1349 = vmatpush1.msra.mxu0 0.0
  %1350 = vmatprep.subr.mxu0 0.0
  %1351 = vmatpush1.msra.mxu0 0.0
  %1352 = vmatprep.subr.mxu0 0.0
  %1353 = vmatpush1.msra.mxu0 0.0
  %1354 = vmatprep.subr.mxu0 0.0
  %1355 = vmatpush1.msra.mxu0 0.0
  %1356 = vmatprep.subr.mxu0 0.0
  %1357 = vmatpush1.msra.mxu0 0.0
  %1358 = vmatprep.subr.mxu0 0.0
  %1359 = vmatpush1.msra.mxu0 0.0
  %1360 = vmatprep.subr.mxu0 0.0
  %1361 = vmatpush1.msra.mxu0 0.0
  %1362 = vmatprep.subr.mxu0 0.0
  %1363 = vmatpush1.msra.mxu0 0.0
  %1364 = vmatprep.subr.mxu0 0.0
  %1365 = vmatpush1.msra.mxu0 0.0
  %1366 = vmatprep.subr.mxu0 0.0
  %1367 = vmatpush1.msra.mxu0 0.0
  %1368 = vmatprep.subr.mxu0 0.0
  %1369 = vmatpush1.msra.mxu0 0.0
  %1370 = vmatprep.subr.mxu0 0.0
  %1371 = vmatpush1.msra.mxu0 0.0
  %1372 = vmatprep.subr.mxu0 0.0
  %1373 = vmatpush1.msra.mxu0 0.0
  %1374 = vmatprep.subr.mxu0 0.0
  %1375 = vmatpush1.msra.mxu0 0.0
  %1376 = vmatprep.subr.mxu0 0.0
  %1377 = vmatpush1.msra.mxu0 0.0
  %1378 = vmatprep.subr.mxu0 0.0
  %1379 = vmatpush1.msra.mxu0 0.0
  %1380 = vmatprep.subr.mxu0 0.0
  %1381 = vmatpush1.msra.mxu0 0.0
  %1382 = vmatprep.subr.mxu0 0.0
  %1383 = vmatpush1.msra.mxu0 0.0
  %1384 = vmatprep.subr.mxu0 0.0
  %1385 = vmatpush1.msra.mxu0 0.0
  %1386 = vmatprep.subr.mxu0 0.0
  %1387 = vmatpush1.msra.mxu0 0.0
  %1388 = vmatprep.subr.mxu0 0.0
  %1389 = vmatpush1.msra.mxu0 0.0
  %1390 = vmatprep.subr.mxu0 0.0
  %1391 = vmatpush1.msra.mxu0 0.0
  %1392 = vmatprep.subr.mxu0 0.0
  %1393 = vmatpush1.msra.mxu0 0.0
  %1394 = vmatprep.subr.mxu0 0.0
  %1395 = vmatpush1.msra.mxu0 0.0
  %1396 = vmatprep.subr.mxu0 0.0
  %1397 = vmatpush1.msra.mxu0 0.0
  %1398 = vmatprep.subr.mxu0 0.0
  %1399 = vmatpush1.msra.mxu0 0.0
  %1400 = vmatprep.subr.mxu0 0.0
  %1401 = vmatpush1.msra.mxu0 0.0
  %1402 = vmatprep.subr.mxu0 0.0
  %1403 = vmatpush1.msra.mxu0 0.0
  %1404 = vmatprep.subr.mxu0 0.0
  %1405 = vmatpush1.msra.mxu0 0.0
  %1406 = vmatprep.mubr.f32.mxu0 0.0
  %v1407 = vand.u32 %v908, 4294901760
  %1408 = vmatmul.mubr.f32.gmra.mrb[0].mxu0 %v1407
  %v1409 = vpop.f32.mrb[0].mxu0
  %v1410 = vadd.f32 %v1331, %v1409
  %v1411 = vpop.f32.mrb[0].mxu0
  %1412 = vmatprep.mubr.f32.mxu0 0.0
  %v1413 = vand.u32 %v911, 4294901760
  %1414 = vmatmul.mubr.f32.gmra.mrb[0].mxu0 %v1413
  %v1415 = vpop.f32.mrb[0].mxu0
  %v1416 = vadd.f32 %v1337, %v1415
  %v1417 = vpop.f32.mrb[0].mxu0
  %1418 = vdwg.mxu0
  %v1419 = vmax.f32 %v1410, 0.0
  %v1420 = vmax.f32 %v1416, 0.0
  %1423 = vrot.lane.b32.xlu0 %v1419, 120
  %v1424 = vpop.permute.xlu0 %1423
  %1425 = vrot.lane.b32.xlu0 %v1420, 120
  %v1426 = vpop.permute.xlu0 %1425
  %v1429 = vadd.f32 %v1419, %v1424
  %v1430 = vadd.f32 %v1420, %v1426
  %v1431 = vmul.f32 %v1429, 0.5
  %v1432 = vmul.f32 %v1430, 0.5
  %1433 = vst.msk [vmem:[#allocation5] sm:$0xff] %vm33, %v1431
  %1434 = vst.msk [vmem:[#allocation5 + $0x8] sm:$0xff] %vm33, %v1432
  %v1435 = vld [vmem:[#allocation5] ss:$2 sm:$0xff]
  %s1436 = scalar_lea.vmem [#allocation5], 1
  %v1437 = vld [vmem:[%s1436] ss:$2 sm:$0xff]
  %v1438 = vmax.f32 %v1435, %v1437
  %1440 = vrot.lane.b32.xlu0 %v1438, 124
  %v1441 = vpop.permute.xlu0 %1440
  %v1443 = vmax.f32 %v1438, %v1441
  %vm1444 = vcmask 24576
  %1445 = vst.msk [vmem:[#allocation6] sm:$0x1] %vm1444, %v1443
  %1447 = vrot.lane.b32.xlu0 %v1443, 4
  %v1448 = vpop.permute.xlu0 %1447
  %vm1450 = vcmask 58401
  %1451 = vst.msk [vmem:[#allocation6 - $0x1] sm:$0x2] %vm1450, %v1448
  %1452 = vrot.lane.b32.xlu0 %v1443, 8
  %v1453 = vpop.permute.xlu0 %1452
  %vm1455 = vcmask 92226
  %1456 = vst.msk [vmem:[#allocation6 - $0x2] sm:$0x4] %vm1455, %v1453
  %1457 = vrot.lane.b32.xlu0 %v1443, 12
  %v1458 = vpop.permute.xlu0 %1457
  %vm1460 = vcmask 126051
  %1461 = vst.msk [vmem:[#allocation6 - $0x3] sm:$0x8] %vm1460, %v1458
  %vm1462 = vcmask 28676
  %1463 = vst.msk [vmem:[#allocation6 - $0x3] sm:$0x10] %vm1462, %v1443
  %vm1464 = vcmask 62501
  %1465 = vst.msk [vmem:[#allocation6 - $0x4] sm:$0x20] %vm1464, %v1448
  %vm1466 = vcmask 96326
  %1467 = vst.msk [vmem:[#allocation6 - $0x5] sm:$0x40] %vm1466, %v1453
  %vm1468 = vcmask 130151
  %1469 = vst.msk [vmem:[#allocation6 - $0x6] sm:$0x80] %vm1468, %v1458
  %v1470 = vld [vmem:[#allocation6] sm:$0x3]
  %v1471 = vld [vmem:[%s5] sm:$0xff]
  %v1472 = vld [vmem:[%s5 + $0x8] sm:$0xff]
  %v1473 = vld [vmem:[%s6] sm:$0x1]
  %v1475 = vlaneseq
  %v1476 = vshrl.u32 %v1475, 7
  %v1477 = vsub.s32 0, %v1476
  %v1478 = vrot.slane %v1473, %v1477
  %vm1480 = vcmask 130048
  %v1482 = vsel %vm1480, %v1470, 0
  %1484 = vmatprep.subr.mxu0 0.0
  %v1485 = vand.u32 %v1471, 4294901760
  %1486 = vmatpush1.msra.mxu0 %v1485
  %1487 = vmatprep.subr.mxu0 0.0
  %v1488 = vand.u32 %v1472, 4294901760
  %1489 = vmatpush1.msra.mxu0 %v1488
  %1490 = vmatprep.subr.mxu0 0.0
  %1491 = vmatpush1.msra.mxu0 0.0
  %1492 = vmatprep.subr.mxu0 0.0
  %1493 = vmatpush1.msra.mxu0 0.0
  %1494 = vmatprep.subr.mxu0 0.0
  %1495 = vmatpush1.msra.mxu0 0.0
  %1496 = vmatprep.subr.mxu0 0.0
  %1497 = vmatpush1.msra.mxu0 0.0
  %1498 = vmatprep.subr.mxu0 0.0
  %1499 = vmatpush1.msra.mxu0 0.0
  %1500 = vmatprep.subr.mxu0 0.0
  %1501 = vmatpush1.msra.mxu0 0.0
  %1502 = vmatprep.subr.mxu0 0.0
  %1503 = vmatpush1.msra.mxu0 0.0
  %1504 = vmatprep.subr.mxu0 0.0
  %1505 = vmatpush1.msra.mxu0 0.0
  %1506 = vmatprep.subr.mxu0 0.0
  %1507 = vmatpush1.msra.mxu0 0.0
  %1508 = vmatprep.subr.mxu0 0.0
  %1509 = vmatpush1.msra.mxu0 0.0
  %1510 = vmatprep.subr.mxu0 0.0
  %1511 = vmatpush1.msra.mxu0 0.0
  %1512 = vmatprep.subr.mxu0 0.0
  %1513 = vmatpush1.msra.mxu0 0.0
  %1514 = vmatprep.subr.mxu0 0.0
  %1515 = vmatpush1.msra.mxu0 0.0
  %1516 = vmatprep.subr.mxu0 0.0
  %1517 = vmatpush1.msra.mxu0 0.0
  %1518 = vmatprep.subr.mxu0 0.0
  %1519 = vmatpush1.msra.mxu0 0.0
  %1520 = vmatprep.subr.mxu0 0.0
  %1521 = vmatpush1.msra.mxu0 0.0
  %1522 = vmatprep.subr.mxu0 0.0
  %1523 = vmatpush1.msra.mxu0 0.0
  %1524 = vmatprep.subr.mxu0 0.0
  %1525 = vmatpush1.msra.mxu0 0.0
  %1526 = vmatprep.subr.mxu0 0.0
  %1527 = vmatpush1.msra.mxu0 0.0
  %1528 = vmatprep.subr.mxu0 0.0
  %1529 = vmatpush1.msra.mxu0 0.0
  %1530 = vmatprep.subr.mxu0 0.0
  %1531 = vmatpush1.msra.mxu0 0.0
  %1532 = vmatprep.subr.mxu0 0.0
  %1533 = vmatpush1.msra.mxu0 0.0
  %1534 = vmatprep.subr.mxu0 0.0
  %1535 = vmatpush1.msra.mxu0 0.0
  %1536 = vmatprep.subr.mxu0 0.0
  %1537 = vmatpush1.msra.mxu0 0.0
  %1538 = vmatprep.subr.mxu0 0.0
  %1539 = vmatpush1.msra.mxu0 0.0
  %1540 = vmatprep.subr.mxu0 0.0
  %1541 = vmatpush1.msra.mxu0 0.0
  %1542 = vmatprep.subr.mxu0 0.0
  %1543 = vmatpush1.msra.mxu0 0.0
  %1544 = vmatprep.subr.mxu0 0.0
  %1545 = vmatpush1.msra.mxu0 0.0
  %1546 = vmatprep.subr.mxu0 0.0
  %1547 = vmatpush1.msra.mxu0 0.0
  %1548 = vmatprep.subr.mxu0 0.0
  %1549 = vmatpush1.msra.mxu0 0.0
  %1550 = vmatprep.mubr.f32.mxu0 0.0
  %v1551 = vand.u32 %v1482, 4294901760
  %v1552 = vsub.f32 %v1482, %v1551
  %v1553 = vand.u32 %v1552, 4294901760
  %v1554 = vsub.f32 %v1552, %v1553
  %v1555 = vand.u32 %v1554, 4294901760
  %1556 = vmatmul.mubr.f32.gmra.mrb[0].mxu0 %v1555
  %v1557 = vpop.f32.mrb[0].mxu0
  %v1558 = vadd.f32 %v1478, %v1557
  %v1559 = vpop.f32.mrb[0].mxu0
  %1560 = vdwg.mxu0
  %1561 = vmatprep.subr.mxu0 0.0
  %v1562 = vand.u32 %v1471, 4294901760
  %v1563 = vsub.f32 %v1471, %v1562
  %v1564 = vand.u32 %v1563, 4294901760
  %v1565 = vsub.f32 %v1563, %v1564
  %v1566 = vand.u32 %v1565, 4294901760
  %1567 = vmatpush1.msra.mxu0 %v1566
  %1568 = vmatprep.subr.mxu0 0.0
  %v1569 = vand.u32 %v1472, 4294901760
  %v1570 = vsub.f32 %v1472, %v1569
  %v1571 = vand.u32 %v1570, 4294901760
  %v1572 = vsub.f32 %v1570, %v1571
  %v1573 = vand.u32 %v1572, 4294901760
  %1574 = vmatpush1.msra.mxu0 %v1573
  %1575 = vmatprep.subr.mxu0 0.0
  %1576 = vmatpush1.msra.mxu0 0.0
  %1577 = vmatprep.subr.mxu0 0.0
  %1578 = vmatpush1.msra.mxu0 0.0
  %1579 = vmatprep.subr.mxu0 0.0
  %1580 = vmatpush1.msra.mxu0 0.0
  %1581 = vmatprep.subr.mxu0 0.0
  %1582 = vmatpush1.msra.mxu0 0.0
  %1583 = vmatprep.subr.mxu0 0.0
  %1584 = vmatpush1.msra.mxu0 0.0
  %1585 = vmatprep.subr.mxu0 0.0
  %1586 = vmatpush1.msra.mxu0 0.0
  %1587 = vmatprep.subr.mxu0 0.0
  %1588 = vmatpush1.msra.mxu0 0.0
  %1589 = vmatprep.subr.mxu0 0.0
  %1590 = vmatpush1.msra.mxu0 0.0
  %1591 = vmatprep.subr.mxu0 0.0
  %1592 = vmatpush1.msra.mxu0 0.0
  %1593 = vmatprep.subr.mxu0 0.0
  %1594 = vmatpush1.msra.mxu0 0.0
  %1595 = vmatprep.subr.mxu0 0.0
  %1596 = vmatpush1.msra.mxu0 0.0
  %1597 = vmatprep.subr.mxu0 0.0
  %1598 = vmatpush1.msra.mxu0 0.0
  %1599 = vmatprep.subr.mxu0 0.0
  %1600 = vmatpush1.msra.mxu0 0.0
  %1601 = vmatprep.subr.mxu0 0.0
  %1602 = vmatpush1.msra.mxu0 0.0
  %1603 = vmatprep.subr.mxu0 0.0
  %1604 = vmatpush1.msra.mxu0 0.0
  %1605 = vmatprep.subr.mxu0 0.0
  %1606 = vmatpush1.msra.mxu0 0.0
  %1607 = vmatprep.subr.mxu0 0.0
  %1608 = vmatpush1.msra.mxu0 0.0
  %1609 = vmatprep.subr.mxu0 0.0
  %1610 = vmatpush1.msra.mxu0 0.0
  %1611 = vmatprep.subr.mxu0 0.0
  %1612 = vmatpush1.msra.mxu0 0.0
  %1613 = vmatprep.subr.mxu0 0.0
  %1614 = vmatpush1.msra.mxu0 0.0
  %1615 = vmatprep.subr.mxu0 0.0
  %1616 = vmatpush1.msra.mxu0 0.0
  %1617 = vmatprep.subr.mxu0 0.0
  %1618 = vmatpush1.msra.mxu0 0.0
  %1619 = vmatprep.subr.mxu0 0.0
  %1620 = vmatpush1.msra.mxu0 0.0
  %1621 = vmatprep.subr.mxu0 0.0
  %1622 = vmatpush1.msra.mxu0 0.0
  %1623 = vmatprep.subr.mxu0 0.0
  %1624 = vmatpush1.msra.mxu0 0.0
  %1625 = vmatprep.subr.mxu0 0.0
  %1626 = vmatpush1.msra.mxu0 0.0
  %1627 = vmatprep.subr.mxu0 0.0
  %1628 = vmatpush1.msra.mxu0 0.0
  %1629 = vmatprep.subr.mxu0 0.0
  %1630 = vmatpush1.msra.mxu0 0.0
  %1631 = vmatprep.subr.mxu0 0.0
  %1632 = vmatpush1.msra.mxu0 0.0
  %1633 = vmatprep.subr.mxu0 0.0
  %1634 = vmatpush1.msra.mxu0 0.0
  %1635 = vmatprep.mubr.f32.mxu0 0.0
  %v1636 = vand.u32 %v1482, 4294901760
  %1637 = vmatmul.mubr.f32.gmra.mrb[0].mxu0 %v1636
  %v1638 = vpop.f32.mrb[0].mxu0
  %v1639 = vadd.f32 %v1558, %v1638
  %v1640 = vpop.f32.mrb[0].mxu0
  %1641 = vdwg.mxu0
  %1642 = vmatprep.subr.mxu0 0.0
  %v1643 = vand.u32 %v1471, 4294901760
  %v1644 = vsub.f32 %v1471, %v1643
  %1645 = vmatpush1.msra.mxu0 %v1644
  %1646 = vmatprep.subr.mxu0 0.0
  %v1647 = vand.u32 %v1472, 4294901760
  %v1648 = vsub.f32 %v1472, %v1647
  %1649 = vmatpush1.msra.mxu0 %v1648
  %1650 = vmatprep.subr.mxu0 0.0
  %1651 = vmatpush1.msra.mxu0 0.0
  %1652 = vmatprep.subr.mxu0 0.0
  %1653 = vmatpush1.msra.mxu0 0.0
  %1654 = vmatprep.subr.mxu0 0.0
  %1655 = vmatpush1.msra.mxu0 0.0
  %1656 = vmatprep.subr.mxu0 0.0
  %1657 = vmatpush1.msra.mxu0 0.0
  %1658 = vmatprep.subr.mxu0 0.0
  %1659 = vmatpush1.msra.mxu0 0.0
  %1660 = vmatprep.subr.mxu0 0.0
  %1661 = vmatpush1.msra.mxu0 0.0
  %1662 = vmatprep.subr.mxu0 0.0
  %1663 = vmatpush1.msra.mxu0 0.0
  %1664 = vmatprep.subr.mxu0 0.0
  %1665 = vmatpush1.msra.mxu0 0.0
  %1666 = vmatprep.subr.mxu0 0.0
  %1667 = vmatpush1.msra.mxu0 0.0
  %1668 = vmatprep.subr.mxu0 0.0
  %1669 = vmatpush1.msra.mxu0 0.0
  %1670 = vmatprep.subr.mxu0 0.0
  %1671 = vmatpush1.msra.mxu0 0.0
  %1672 = vmatprep.subr.mxu0 0.0
  %1673 = vmatpush1.msra.mxu0 0.0
  %1674 = vmatprep.subr.mxu0 0.0
  %1675 = vmatpush1.msra.mxu0 0.0
  %1676 = vmatprep.subr.mxu0 0.0
  %1677 = vmatpush1.msra.mxu0 0.0
  %1678 = vmatprep.subr.mxu0 0.0
  %1679 = vmatpush1.msra.mxu0 0.0
  %1680 = vmatprep.subr.mxu0 0.0
  %1681 = vmatpush1.msra.mxu0 0.0
  %1682 = vmatprep.subr.mxu0 0.0
  %1683 = vmatpush1.msra.mxu0 0.0
  %1684 = vmatprep.subr.mxu0 0.0
  %1685 = vmatpush1.msra.mxu0 0.0
  %1686 = vmatprep.subr.mxu0 0.0
  %1687 = vmatpush1.msra.mxu0 0.0
  %1688 = vmatprep.subr.mxu0 0.0
  %1689 = vmatpush1.msra.mxu0 0.0
  %1690 = vmatprep.subr.mxu0 0.0
  %1691 = vmatpush1.msra.mxu0 0.0
  %1692 = vmatprep.subr.mxu0 0.0
  %1693 = vmatpush1.msra.mxu0 0.0
  %1694 = vmatprep.subr.mxu0 0.0
  %1695 = vmatpush1.msra.mxu0 0.0
  %1696 = vmatprep.subr.mxu0 0.0
  %1697 = vmatpush1.msra.mxu0 0.0
  %1698 = vmatprep.subr.mxu0 0.0
  %1699 = vmatpush1.msra.mxu0 0.0
  %1700 = vmatprep.subr.mxu0 0.0
  %1701 = vmatpush1.msra.mxu0 0.0
  %1702 = vmatprep.subr.mxu0 0.0
  %1703 = vmatpush1.msra.mxu0 0.0
  %1704 = vmatprep.subr.mxu0 0.0
  %1705 = vmatpush1.msra.mxu0 0.0
  %1706 = vmatprep.subr.mxu0 0.0
  %1707 = vmatpush1.msra.mxu0 0.0
  %1708 = vmatprep.subr.mxu0 0.0
  %1709 = vmatpush1.msra.mxu0 0.0
  %1710 = vmatprep.mubr.f32.mxu0 0.0
  %v1711 = vand.u32 %v1482, 4294901760
  %v1712 = vsub.f32 %v1482, %v1711
  %1713 = vmatmul.mubr.f32.gmra.mrb[0].mxu0 %v1712
  %v1714 = vpop.f32.mrb[0].mxu0
  %v1715 = vadd.f32 %v1639, %v1714
  %v1716 = vpop.f32.mrb[0].mxu0
  %1717 = vdwg.mxu0
  %1718 = vmatprep.subr.mxu0 0.0
  %v1719 = vand.u32 %v1471, 4294901760
  %1720 = vmatpush1.msra.mxu0 %v1719
  %1721 = vmatprep.subr.mxu0 0.0
  %v1722 = vand.u32 %v1472, 4294901760
  %1723 = vmatpush1.msra.mxu0 %v1722
  %1724 = vmatprep.subr.mxu0 0.0
  %1725 = vmatpush1.msra.mxu0 0.0
  %1726 = vmatprep.subr.mxu0 0.0
  %1727 = vmatpush1.msra.mxu0 0.0
  %1728 = vmatprep.subr.mxu0 0.0
  %1729 = vmatpush1.msra.mxu0 0.0
  %1730 = vmatprep.subr.mxu0 0.0
  %1731 = vmatpush1.msra.mxu0 0.0
  %1732 = vmatprep.subr.mxu0 0.0
  %1733 = vmatpush1.msra.mxu0 0.0
  %1734 = vmatprep.subr.mxu0 0.0
  %1735 = vmatpush1.msra.mxu0 0.0
  %1736 = vmatprep.subr.mxu0 0.0
  %1737 = vmatpush1.msra.mxu0 0.0
  %1738 = vmatprep.subr.mxu0 0.0
  %1739 = vmatpush1.msra.mxu0 0.0
  %1740 = vmatprep.subr.mxu0 0.0
  %1741 = vmatpush1.msra.mxu0 0.0
  %1742 = vmatprep.subr.mxu0 0.0
  %1743 = vmatpush1.msra.mxu0 0.0
  %1744 = vmatprep.subr.mxu0 0.0
  %1745 = vmatpush1.msra.mxu0 0.0
  %1746 = vmatprep.subr.mxu0 0.0
  %1747 = vmatpush1.msra.mxu0 0.0
  %1748 = vmatprep.subr.mxu0 0.0
  %1749 = vmatpush1.msra.mxu0 0.0
  %1750 = vmatprep.subr.mxu0 0.0
  %1751 = vmatpush1.msra.mxu0 0.0
  %1752 = vmatprep.subr.mxu0 0.0
  %1753 = vmatpush1.msra.mxu0 0.0
  %1754 = vmatprep.subr.mxu0 0.0
  %1755 = vmatpush1.msra.mxu0 0.0
  %1756 = vmatprep.subr.mxu0 0.0
  %1757 = vmatpush1.msra.mxu0 0.0
  %1758 = vmatprep.subr.mxu0 0.0
  %1759 = vmatpush1.msra.mxu0 0.0
  %1760 = vmatprep.subr.mxu0 0.0
  %1761 = vmatpush1.msra.mxu0 0.0
  %1762 = vmatprep.subr.mxu0 0.0
  %1763 = vmatpush1.msra.mxu0 0.0
  %1764 = vmatprep.subr.mxu0 0.0
  %1765 = vmatpush1.msra.mxu0 0.0
  %1766 = vmatprep.subr.mxu0 0.0
  %1767 = vmatpush1.msra.mxu0 0.0
  %1768 = vmatprep.subr.mxu0 0.0
  %1769 = vmatpush1.msra.mxu0 0.0
  %1770 = vmatprep.subr.mxu0 0.0
  %1771 = vmatpush1.msra.mxu0 0.0
  %1772 = vmatprep.subr.mxu0 0.0
  %1773 = vmatpush1.msra.mxu0 0.0
  %1774 = vmatprep.subr.mxu0 0.0
  %1775 = vmatpush1.msra.mxu0 0.0
  %1776 = vmatprep.subr.mxu0 0.0
  %1777 = vmatpush1.msra.mxu0 0.0
  %1778 = vmatprep.subr.mxu0 0.0
  %1779 = vmatpush1.msra.mxu0 0.0
  %1780 = vmatprep.subr.mxu0 0.0
  %1781 = vmatpush1.msra.mxu0 0.0
  %1782 = vmatprep.subr.mxu0 0.0
  %1783 = vmatpush1.msra.mxu0 0.0
  %1784 = vmatprep.mubr.f32.mxu0 0.0
  %v1785 = vand.u32 %v1482, 4294901760
  %v1786 = vsub.f32 %v1482, %v1785
  %v1787 = vand.u32 %v1786, 4294901760
  %1788 = vmatmul.mubr.f32.gmra.mrb[0].mxu0 %v1787
  %v1789 = vpop.f32.mrb[0].mxu0
  %v1790 = vadd.f32 %v1715, %v1789
  %v1791 = vpop.f32.mrb[0].mxu0
  %1792 = vdwg.mxu0
  %1793 = vmatprep.subr.mxu0 0.0
  %v1794 = vand.u32 %v1471, 4294901760
  %v1795 = vsub.f32 %v1471, %v1794
  %v1796 = vand.u32 %v1795, 4294901760
  %1797 = vmatpush1.msra.mxu0 %v1796
  %1798 = vmatprep.subr.mxu0 0.0
  %v1799 = vand.u32 %v1472, 4294901760
  %v1800 = vsub.f32 %v1472, %v1799
  %v1801 = vand.u32 %v1800, 4294901760
  %1802 = vmatpush1.msra.mxu0 %v1801
  %1803 = vmatprep.subr.mxu0 0.0
  %1804 = vmatpush1.msra.mxu0 0.0
  %1805 = vmatprep.subr.mxu0 0.0
  %1806 = vmatpush1.msra.mxu0 0.0
  %1807 = vmatprep.subr.mxu0 0.0
  %1808 = vmatpush1.msra.mxu0 0.0
  %1809 = vmatprep.subr.mxu0 0.0
  %1810 = vmatpush1.msra.mxu0 0.0
  %1811 = vmatprep.subr.mxu0 0.0
  %1812 = vmatpush1.msra.mxu0 0.0
  %1813 = vmatprep.subr.mxu0 0.0
  %1814 = vmatpush1.msra.mxu0 0.0
  %1815 = vmatprep.subr.mxu0 0.0
  %1816 = vmatpush1.msra.mxu0 0.0
  %1817 = vmatprep.subr.mxu0 0.0
  %1818 = vmatpush1.msra.mxu0 0.0
  %1819 = vmatprep.subr.mxu0 0.0
  %1820 = vmatpush1.msra.mxu0 0.0
  %1821 = vmatprep.subr.mxu0 0.0
  %1822 = vmatpush1.msra.mxu0 0.0
  %1823 = vmatprep.subr.mxu0 0.0
  %1824 = vmatpush1.msra.mxu0 0.0
  %1825 = vmatprep.subr.mxu0 0.0
  %1826 = vmatpush1.msra.mxu0 0.0
  %1827 = vmatprep.subr.mxu0 0.0
  %1828 = vmatpush1.msra.mxu0 0.0
  %1829 = vmatprep.subr.mxu0 0.0
  %1830 = vmatpush1.msra.mxu0 0.0
  %1831 = vmatprep.subr.mxu0 0.0
  %1832 = vmatpush1.msra.mxu0 0.0
  %1833 = vmatprep.subr.mxu0 0.0
  %1834 = vmatpush1.msra.mxu0 0.0
  %1835 = vmatprep.subr.mxu0 0.0
  %1836 = vmatpush1.msra.mxu0 0.0
  %1837 = vmatprep.subr.mxu0 0.0
  %1838 = vmatpush1.msra.mxu0 0.0
  %1839 = vmatprep.subr.mxu0 0.0
  %1840 = vmatpush1.msra.mxu0 0.0
  %1841 = vmatprep.subr.mxu0 0.0
  %1842 = vmatpush1.msra.mxu0 0.0
  %1843 = vmatprep.subr.mxu0 0.0
  %1844 = vmatpush1.msra.mxu0 0.0
  %1845 = vmatprep.subr.mxu0 0.0
  %1846 = vmatpush1.msra.mxu0 0.0
  %1847 = vmatprep.subr.mxu0 0.0
  %1848 = vmatpush1.msra.mxu0 0.0
  %1849 = vmatprep.subr.mxu0 0.0
  %1850 = vmatpush1.msra.mxu0 0.0
  %1851 = vmatprep.subr.mxu0 0.0
  %1852 = vmatpush1.msra.mxu0 0.0
  %1853 = vmatprep.subr.mxu0 0.0
  %1854 = vmatpush1.msra.mxu0 0.0
  %1855 = vmatprep.subr.mxu0 0.0
  %1856 = vmatpush1.msra.mxu0 0.0
  %1857 = vmatprep.subr.mxu0 0.0
  %1858 = vmatpush1.msra.mxu0 0.0
  %1859 = vmatprep.subr.mxu0 0.0
  %1860 = vmatpush1.msra.mxu0 0.0
  %1861 = vmatprep.subr.mxu0 0.0
  %1862 = vmatpush1.msra.mxu0 0.0
  %1863 = vmatprep.mubr.f32.mxu0 0.0
  %v1864 = vand.u32 %v1482, 4294901760
  %1865 = vmatmul.mubr.f32.gmra.mrb[0].mxu0 %v1864
  %v1866 = vpop.f32.mrb[0].mxu0
  %v1867 = vadd.f32 %v1790, %v1866
  %v1868 = vpop.f32.mrb[0].mxu0
  %1869 = vdwg.mxu0
  %1870 = vmatprep.subr.mxu0 0.0
  %v1871 = vand.u32 %v1471, 4294901760
  %1872 = vmatpush1.msra.mxu0 %v1871
  %1873 = vmatprep.subr.mxu0 0.0
  %v1874 = vand.u32 %v1472, 4294901760
  %1875 = vmatpush1.msra.mxu0 %v1874
  %1876 = vmatprep.subr.mxu0 0.0
  %1877 = vmatpush1.msra.mxu0 0.0
  %1878 = vmatprep.subr.mxu0 0.0
  %1879 = vmatpush1.msra.mxu0 0.0
  %1880 = vmatprep.subr.mxu0 0.0
  %1881 = vmatpush1.msra.mxu0 0.0
  %1882 = vmatprep.subr.mxu0 0.0
  %1883 = vmatpush1.msra.mxu0 0.0
  %1884 = vmatprep.subr.mxu0 0.0
  %1885 = vmatpush1.msra.mxu0 0.0
  %1886 = vmatprep.subr.mxu0 0.0
  %1887 = vmatpush1.msra.mxu0 0.0
  %1888 = vmatprep.subr.mxu0 0.0
  %1889 = vmatpush1.msra.mxu0 0.0
  %1890 = vmatprep.subr.mxu0 0.0
  %1891 = vmatpush1.msra.mxu0 0.0
  %1892 = vmatprep.subr.mxu0 0.0
  %1893 = vmatpush1.msra.mxu0 0.0
  %1894 = vmatprep.subr.mxu0 0.0
  %1895 = vmatpush1.msra.mxu0 0.0
  %1896 = vmatprep.subr.mxu0 0.0
  %1897 = vmatpush1.msra.mxu0 0.0
  %1898 = vmatprep.subr.mxu0 0.0
  %1899 = vmatpush1.msra.mxu0 0.0
  %1900 = vmatprep.subr.mxu0 0.0
  %1901 = vmatpush1.msra.mxu0 0.0
  %1902 = vmatprep.subr.mxu0 0.0
  %1903 = vmatpush1.msra.mxu0 0.0
  %1904 = vmatprep.subr.mxu0 0.0
  %1905 = vmatpush1.msra.mxu0 0.0
  %1906 = vmatprep.subr.mxu0 0.0
  %1907 = vmatpush1.msra.mxu0 0.0
  %1908 = vmatprep.subr.mxu0 0.0
  %1909 = vmatpush1.msra.mxu0 0.0
  %1910 = vmatprep.subr.mxu0 0.0
  %1911 = vmatpush1.msra.mxu0 0.0
  %1912 = vmatprep.subr.mxu0 0.0
  %1913 = vmatpush1.msra.mxu0 0.0
  %1914 = vmatprep.subr.mxu0 0.0
  %1915 = vmatpush1.msra.mxu0 0.0
  %1916 = vmatprep.subr.mxu0 0.0
  %1917 = vmatpush1.msra.mxu0 0.0
  %1918 = vmatprep.subr.mxu0 0.0
  %1919 = vmatpush1.msra.mxu0 0.0
  %1920 = vmatprep.subr.mxu0 0.0
  %1921 = vmatpush1.msra.mxu0 0.0
  %1922 = vmatprep.subr.mxu0 0.0
  %1923 = vmatpush1.msra.mxu0 0.0
  %1924 = vmatprep.subr.mxu0 0.0
  %1925 = vmatpush1.msra.mxu0 0.0
  %1926 = vmatprep.subr.mxu0 0.0
  %1927 = vmatpush1.msra.mxu0 0.0
  %1928 = vmatprep.subr.mxu0 0.0
  %1929 = vmatpush1.msra.mxu0 0.0
  %1930 = vmatprep.subr.mxu0 0.0
  %1931 = vmatpush1.msra.mxu0 0.0
  %1932 = vmatprep.subr.mxu0 0.0
  %1933 = vmatpush1.msra.mxu0 0.0
  %1934 = vmatprep.subr.mxu0 0.0
  %1935 = vmatpush1.msra.mxu0 0.0
  %1936 = vmatprep.mubr.f32.mxu0 0.0
  %v1937 = vand.u32 %v1482, 4294901760
  %1938 = vmatmul.mubr.f32.gmra.mrb[0].mxu0 %v1937
  %v1939 = vpop.f32.mrb[0].mxu0
  %v1940 = vadd.f32 %v1867, %v1939
  %v1941 = vpop.f32.mrb[0].mxu0
  %1942 = vdwg.mxu0
  %vm1943 = vcmask 9216
  %v1944 = vsel %vm1943, %v1940, -inf
  %1945 = vmax.xlane.f32.xlu0 %v1944
  %v1946 = vpop.xlane.xlu0 %1945
  %v1947 = vsub.f32 %v1940, %v1946
  %v1948 = vmul.f32 %v1947, 1.442695
  %v1949 = vpow.pop %v1948
  %v1950 = vsel %vm1943, %v1949, 0.0
  %1951 = vadd.xlane.f32.xlu0 %v1950
  %v1952 = vpop.xlane.xlu0 %1951
  %v1953 = vrcp.pop %v1952
  %v1954 = vmul.f32 %v1949, %v1953
  %1955 = vst.msk [vmem:[%s7] sm:$0x3] %vm1943, %v1954
  // Predicated region
  $region30: #{discriminator_forward.1} parent=0 // pred_check
    _
  $region31: #{discriminator_forward.1} parent=0 // pred_check_branch
    %1957 = sbr.rel (0) target = $region33
  $region32: #{discriminator_forward.1} parent=0 // pred_region
    _
  $region33: #{discriminator_forward.1} parent=0 // pred_fallthru
    _
  // Predicated region
  $region34: #{discriminator_forward.1} parent=0 // pred_check
    _
  $region35: #{discriminator_forward.1} parent=0 // pred_check_branch
    %1959 = sbr.rel (0) target = $region37
  $region36: #{discriminator_forward.1} parent=0 // pred_region
    _
  $region37: #{discriminator_forward.1} parent=0 // pred_fallthru
    _

</llo_original>
